<compile_context>
chip_gen: v7x
topology: tpu7x:2x2x1
jax: 0.10.0
libtpu: 0.0.40
codegen_flags: <defaults>
</compile_context>

<pallas_src>
import jax
import jax.numpy as jnp
from jax.experimental import pallas as pl
from jax.experimental.pallas import tpu as pltpu


D_IN = 1024        # size_dict['small'][0]
D_HID = 512        # size_dict['small'][1]
N_CLASSES = 2
TOP_K = 1
PAD_OUT = 128      # lane-dense output width (multiple of 128)
MAX_TN = 2048      # max instance-tile rows
VMEM_LIMIT = 40 * 1024 * 1024  # fits tn=2048 f32-in tiles; < physical on v5e/v6e/v7x


def _round_up(x, m):
    return ((x + m - 1) // m) * m


def _mil_fc_kernel(h_ref, w1_ref, b1_ref, w2_ref, b2_ref, out_ref):
    # h_ref : (tn, D_IN)        f32  (cast to bf16 in-kernel)
    # w1_ref: (D_IN, D_HID)     bf16
    # b1_ref: (1, D_HID)        f32
    # w2_ref: (D_HID, PAD_OUT)  bf16  (cols 0:2 = W2, cols 2:4 = W2 copy, rest 0)
    # b2_ref: (1, PAD_OUT)      f32   (same duplication/padding as W2)
    # out_ref: (tn, PAD_OUT)    bf16  (cols 0:2 logits, cols 2:4 probs, rest 0)
    #
    # NOTE: every op below is row-independent; out-of-bounds rows in a partial
    # final grid block hold unspecified data and must stay row-local.

    # Linear(1024, 512) + ReLU  (MXU, bf16 inputs, f32 accumulate)
    h = h_ref[...].astype(jnp.bfloat16)
    z = jnp.dot(h, w1_ref[...], preferred_element_type=jnp.float32)
    z = jnp.maximum(z + b1_ref[...], 0.0)

    # Linear(512, n_classes), lane-padded to 128 output columns.
    logits = jnp.dot(z.astype(jnp.bfloat16), w2_ref[...],
                     preferred_element_type=jnp.float32) + b2_ref[...]

    col = jax.lax.broadcasted_iota(jnp.int32, logits.shape, 1)
    prob_cols = jnp.logical_and(col >= N_CLASSES, col < 2 * N_CLASSES)

    # Row softmax over the duplicated logits living in cols 2:4 (numerically
    # stable; all other lanes masked out of max / sum).
    masked = jnp.where(prob_cols, logits, jnp.float32(-1e30))
    m = jnp.max(masked, axis=-1, keepdims=True)
    e = jnp.where(prob_cols, jnp.exp(masked - m), 0.0)
    probs = e / jnp.sum(e, axis=-1, keepdims=True)   # nonzero only in cols 2:4

    # Single full-width (unmasked) store: logits in cols 0:2, probs in 2:4.
    out_ref[...] = jnp.where(col < N_CLASSES, logits, probs).astype(out_ref.dtype)


def prepare_params(w1, b1, w2, b2):
    """One-time weight prep (hoisted out of the jitted forward).

    W2/b2 are lane-padded to 128 columns; the 2 real columns are duplicated
    into cols 2:4 so the softmax result lands directly in the probs lanes
    without any cross-lane shuffle in the kernel."""
    w1_b = w1.astype(jnp.bfloat16)
    b1_f = jnp.reshape(b1, (1, D_HID)).astype(jnp.float32)

    w2_f = w2.astype(jnp.float32)
    w2_p = jnp.zeros((D_HID, PAD_OUT), jnp.float32)
    w2_p = w2_p.at[:, 0:N_CLASSES].set(w2_f).at[:, N_CLASSES:2 * N_CLASSES].set(w2_f)
    w2_p = w2_p.astype(jnp.bfloat16)

    b2_f = jnp.reshape(b2, (N_CLASSES,)).astype(jnp.float32)
    b2_p = jnp.zeros((1, PAD_OUT), jnp.float32)
    b2_p = b2_p.at[0, 0:N_CLASSES].set(b2_f).at[0, N_CLASSES:2 * N_CLASSES].set(b2_f)
    return w1_b, b1_f, w2_p, b2_p


def mil_fc_forward(h, w1_b, b1_f, w2_p, b2_p, *, tn=None):
    """Returns (top_instance, Y_prob, Y_hat, y_probs, results_dict) like MIL_fc.forward.

    `h` is f32 [N, 1024]; weights must come from prepare_params()."""
    n, d_in = h.shape
    assert d_in == D_IN

    if tn is None:
        # Big tiles to amortise per-step overhead, but keep >=2 grid steps so
        # both v7x TensorCores get work (harmless on single-TC chips).
        tn = min(MAX_TN, _round_up(pl.cdiv(n, 2), 16))
    tn = max(16, _round_up(tn, 16))
    grid = (pl.cdiv(n, tn),)   # ragged last block handled by Pallas

    cost = pl.CostEstimate(
        flops=2 * n * (D_IN * D_HID + D_HID * PAD_OUT),
        transcendentals=n * PAD_OUT,
        bytes_accessed=(n * D_IN * 4 + D_IN * D_HID * 2
                        + D_HID * PAD_OUT * 2 + D_HID * 4 + PAD_OUT * 4
                        + n * PAD_OUT * 2),
    )

    slab = pl.pallas_call(
        _mil_fc_kernel,
        out_shape=jax.ShapeDtypeStruct((n, PAD_OUT), jnp.bfloat16),
        grid_spec=pltpu.PrefetchScalarGridSpec(
            num_scalar_prefetch=0,
            grid=grid,
            in_specs=[
                pl.BlockSpec((tn, D_IN), lambda i: (i, 0)),           # h tile (f32)
                pl.BlockSpec((D_IN, D_HID), lambda i: (0, 0)),        # W1 (resident)
                pl.BlockSpec((1, D_HID), lambda i: (0, 0)),           # b1
                pl.BlockSpec((D_HID, PAD_OUT), lambda i: (0, 0)),     # W2 padded
                pl.BlockSpec((1, PAD_OUT), lambda i: (0, 0)),         # b2 padded
            ],
            out_specs=pl.BlockSpec((tn, PAD_OUT), lambda i: (i, 0)),
        ),
        compiler_params=pltpu.CompilerParams(
            dimension_semantics=("parallel",),
            vmem_limit_bytes=VMEM_LIMIT),
        cost_estimate=cost,
    )(h, w1_b, b1_f, w2_p, b2_p)

    logits = slab[:, 0:N_CLASSES].astype(jnp.float32)
    y_probs = slab[:, N_CLASSES:2 * N_CLASSES].astype(jnp.float32)

    # ---- glue: top-k over class-1 probability, index-select, argmax, softmax ----
    # top_k == 1 -> argmax over y_probs[:, 1]
    top_instance_idx = jnp.argmax(y_probs[:, 1]).reshape((1,))
    top_instance = jnp.take(logits, top_instance_idx, axis=0)          # (1, 2)
    Y_hat = jnp.argmax(top_instance, axis=1).reshape((1, 1))           # (1, 1)
    Y_prob = jax.nn.softmax(top_instance, axis=1)                      # (1, 2)
    results_dict = {}
    # TODO(synk): return_features=True path references self.classifier.module
    # (DataParallel-only attribute) in the PyTorch module; not reproduced here.
    return top_instance, Y_prob, Y_hat, y_probs, results_dict


def init_params(key):
    """Deterministic synthetic weights (xavier-like), matching nn.Linear shapes
    stored transposed as [in, out] so the kernel computes h @ W + b."""
    k1, k2 = jax.random.split(key, 2)
    s1 = (2.0 / (D_IN + D_HID)) ** 0.5
    s2 = (2.0 / (D_HID + N_CLASSES)) ** 0.5
    w1 = jax.random.normal(k1, (D_IN, D_HID), jnp.float32) * s1
    b1 = jnp.zeros((1, D_HID), jnp.float32)
    w2 = jax.random.normal(k2, (D_HID, N_CLASSES), jnp.float32) * s2
    b2 = jnp.zeros((1, N_CLASSES), jnp.float32)
    return w1, b1, w2, b2


if __name__ == "__main__":
    key = jax.random.PRNGKey(0)
    kh, kp = jax.random.split(key)

    N = 40  # ragged bag size (not a tile multiple) to exercise the partial last block
    h = jax.random.normal(kh, (N, D_IN), jnp.float32)
    w1, b1, w2, b2 = init_params(kp)

    # One-time weight prep, hoisted out of the jitted forward.
    w1_b, b1_f, w2_p, b2_p = prepare_params(w1, b1, w2, b2)
    w1_b, b1_f, w2_p, b2_p = jax.block_until_ready((w1_b, b1_f, w2_p, b2_p))

    fwd = jax.jit(mil_fc_forward)
    top_instance, Y_prob, Y_hat, y_probs, results_dict = fwd(h, w1_b, b1_f, w2_p, b2_p)
    jax.block_until_ready((top_instance, Y_prob, Y_hat, y_probs))

    # ---- correctness check vs pure-JAX reference (same bf16 rounding) ----
    hb = h.astype(jnp.bfloat16).astype(jnp.float32)
    w1b = w1.astype(jnp.bfloat16).astype(jnp.float32)
    w2b = w2.astype(jnp.bfloat16).astype(jnp.float32)
    z_ref = jnp.maximum(hb @ w1b + b1, 0.0)
    logits_ref = z_ref.astype(jnp.bfloat16).astype(jnp.float32) @ w2b + b2
    y_probs_ref = jax.nn.softmax(logits_ref, axis=1)

    assert y_probs.shape == (N, N_CLASSES)
    assert jnp.allclose(y_probs, y_probs_ref, atol=2e-2), "probs mismatch"

    idx_k = int(jnp.argmax(y_probs[:, 1]))
    idx_ref = int(jnp.argmax(y_probs_ref[:, 1]))
    # Selection may only legitimately differ between near-tied instances.
    assert float(jnp.abs(y_probs_ref[idx_k, 1] - y_probs_ref[idx_ref, 1])) < 2e-2, \
        "top-instance selection mismatch"
    assert jnp.allclose(top_instance, logits_ref[idx_k][None, :], atol=5e-2), \
        "top_instance mismatch"
    assert int(Y_hat[0, 0]) == int(jnp.argmax(logits_ref[idx_k])), "Y_hat mismatch"
    assert jnp.allclose(Y_prob, jax.nn.softmax(logits_ref[idx_k][None, :], axis=1),
                        atol=2e-2), "Y_prob mismatch"

    print("KERNEL_OK")
</pallas_src>

<mosaic_0001>
module attributes {stable_mosaic.version = 11 : i64} {
  func.func @_mil_fc_kernel(%arg0: i32, %arg1: memref<32x1024xf32, #tpu.memory_space<vmem>>, %arg2: memref<1024x512xbf16, #tpu.memory_space<vmem>>, %arg3: memref<1x512xf32, #tpu.memory_space<vmem>>, %arg4: memref<512x128xbf16, #tpu.memory_space<vmem>>, %arg5: memref<1x128xf32, #tpu.memory_space<vmem>>, %arg6: memref<32x128xbf16, #tpu.memory_space<vmem>>) attributes {dimension_semantics = [#tpu.dimension_semantics<parallel>], iteration_bounds = array<i64: 2>, scalar_prefetch = 0 : i64, scratch_operands = 0 : i64, tpu.core_type = #tpu.core_type<tc>, window_params = [{transform_indices = @transform_0, window_bounds = array<i64: 32, 1024>}, {pipeline_mode = #tpu.pipeline_mode<synchronous>, transform_indices = @transform_1, window_bounds = array<i64: 1024, 512>}, {pipeline_mode = #tpu.pipeline_mode<synchronous>, transform_indices = @transform_2, window_bounds = array<i64: 1, 512>}, {pipeline_mode = #tpu.pipeline_mode<synchronous>, transform_indices = @transform_3, window_bounds = array<i64: 512, 128>}, {pipeline_mode = #tpu.pipeline_mode<synchronous>, transform_indices = @transform_4, window_bounds = array<i64: 1, 128>}, {transform_indices = @transform_5, window_bounds = array<i64: 32, 128>}]} {
    %c0 = arith.constant 0 : index
    %c0_0 = arith.constant 0 : index
    %0 = vector.load %arg1[%c0, %c0_0] : memref<32x1024xf32, #tpu.memory_space<vmem>>, vector<32x1024xf32>
    %1 = arith.truncf %0 : vector<32x1024xf32> to vector<32x1024xbf16>
    %c0_1 = arith.constant 0 : index
    %c0_2 = arith.constant 0 : index
    %2 = vector.load %arg2[%c0_1, %c0_2] : memref<1024x512xbf16, #tpu.memory_space<vmem>>, vector<1024x512xbf16>
    %cst = arith.constant dense<0.000000e+00> : vector<32x512xf32>
    %3 = tpu.matmul %1, %2, %cst {dimension_numbers = #tpu.dot_dimension_numbers<[1], [0], [0], [1], [0, 0, 1, 1], [], []>} : vector<32x1024xbf16>, vector<1024x512xbf16>, vector<32x512xf32> -> vector<32x512xf32>
    %c0_3 = arith.constant 0 : index
    %c0_4 = arith.constant 0 : index
    %4 = vector.load %arg3[%c0_3, %c0_4] : memref<1x512xf32, #tpu.memory_space<vmem>>, vector<1x512xf32>
    %5 = vector.broadcast %4 : vector<1x512xf32> to vector<32x512xf32>
    %6 = arith.addf %3, %5 : vector<32x512xf32>
    %cst_5 = arith.constant 0.000000e+00 : f32
    %7 = vector.broadcast %cst_5 : f32 to vector<32x512xf32>
    %8 = arith.maximumf %6, %7 : vector<32x512xf32>
    %9 = arith.truncf %8 : vector<32x512xf32> to vector<32x512xbf16>
    %c0_6 = arith.constant 0 : index
    %c0_7 = arith.constant 0 : index
    %10 = vector.load %arg4[%c0_6, %c0_7] : memref<512x128xbf16, #tpu.memory_space<vmem>>, vector<512x128xbf16>
    %cst_8 = arith.constant dense<0.000000e+00> : vector<32x128xf32>
    %11 = tpu.matmul %9, %10, %cst_8 {dimension_numbers = #tpu.dot_dimension_numbers<[1], [0], [0], [1], [0, 0, 1, 1], [], []>} : vector<32x512xbf16>, vector<512x128xbf16>, vector<32x128xf32> -> vector<32x128xf32>
    %c0_9 = arith.constant 0 : index
    %c0_10 = arith.constant 0 : index
    %12 = vector.load %arg5[%c0_9, %c0_10] : memref<1x128xf32, #tpu.memory_space<vmem>>, vector<1x128xf32>
    %13 = vector.broadcast %12 : vector<1x128xf32> to vector<32x128xf32>
    %14 = arith.addf %11, %13 : vector<32x128xf32>
    %15 = tpu.iota {dimensions = array<i32: 1>} : vector<32x128xi32>
    %c2_i32 = arith.constant 2 : i32
    %16 = vector.broadcast %c2_i32 : i32 to vector<32x128xi32>
    %17 = arith.cmpi sge, %15, %16 : vector<32x128xi32>
    %c4_i32 = arith.constant 4 : i32
    %18 = vector.broadcast %c4_i32 : i32 to vector<32x128xi32>
    %19 = arith.cmpi slt, %15, %18 : vector<32x128xi32>
    %20 = arith.andi %17, %19 : vector<32x128xi1>
    %cst_11 = arith.constant -1.000000e+30 : f32
    %21 = vector.broadcast %cst_11 : f32 to vector<32x128xf32>
    %22 = arith.select %20, %14, %21 : vector<32x128xi1>, vector<32x128xf32>
    %cst_12 = arith.constant dense<0xFF800000> : vector<32xf32>
    %23 = vector.multi_reduction <maximumf>, %22, %cst_12 [1] : vector<32x128xf32> to vector<32xf32>
    %24 = vector.shape_cast %23 : vector<32xf32> to vector<32x1xf32>
    %25 = vector.broadcast %24 : vector<32x1xf32> to vector<32x128xf32>
    %26 = arith.subf %22, %25 : vector<32x128xf32>
    %27 = math.exp %26 : vector<32x128xf32>
    %cst_13 = arith.constant 0.000000e+00 : f32
    %28 = vector.broadcast %cst_13 : f32 to vector<32x128xf32>
    %29 = arith.select %20, %27, %28 : vector<32x128xi1>, vector<32x128xf32>
    %cst_14 = arith.constant dense<0.000000e+00> : vector<32xf32>
    %30 = vector.multi_reduction <add>, %29, %cst_14 [1] : vector<32x128xf32> to vector<32xf32>
    %31 = vector.shape_cast %30 : vector<32xf32> to vector<32x1xf32>
    %32 = vector.broadcast %31 : vector<32x1xf32> to vector<32x128xf32>
    %33 = arith.divf %29, %32 : vector<32x128xf32>
    %c2_i32_15 = arith.constant 2 : i32
    %34 = vector.broadcast %c2_i32_15 : i32 to vector<32x128xi32>
    %35 = arith.cmpi slt, %15, %34 : vector<32x128xi32>
    %36 = arith.select %35, %14, %33 : vector<32x128xi1>, vector<32x128xf32>
    %37 = arith.truncf %36 : vector<32x128xf32> to vector<32x128xbf16>
    %c0_16 = arith.constant 0 : index
    %c0_17 = arith.constant 0 : index
    %38 = vector.load %arg6[%c0_16, %c0_17] : memref<32x128xbf16, #tpu.memory_space<vmem>>, vector<32x128xbf16>
    tpu.vector_store %arg6[%c0_16, %c0_17], %37 {strides = array<i32>} : memref<32x128xbf16, #tpu.memory_space<vmem>>, vector<32x128xbf16>,
    return
  }
  func.func @transform_0(%arg0: i32) -> (i32, i32) {
    %c0_i32 = arith.constant 0 : i32
    %c0_i32_0 = arith.constant 0 : i32
    return %arg0, %c0_i32 : i32, i32
  }
  func.func @transform_1(%arg0: i32) -> (i32, i32) {
    %c0_i32 = arith.constant 0 : i32
    %c0_i32_0 = arith.constant 0 : i32
    %c0_i32_1 = arith.constant 0 : i32
    return %c0_i32, %c0_i32_0 : i32, i32
  }
  func.func @transform_2(%arg0: i32) -> (i32, i32) {
    %c0_i32 = arith.constant 0 : i32
    %c0_i32_0 = arith.constant 0 : i32
    %c0_i32_1 = arith.constant 0 : i32
    return %c0_i32, %c0_i32_0 : i32, i32
  }
  func.func @transform_3(%arg0: i32) -> (i32, i32) {
    %c0_i32 = arith.constant 0 : i32
    %c0_i32_0 = arith.constant 0 : i32
    %c0_i32_1 = arith.constant 0 : i32
    return %c0_i32, %c0_i32_0 : i32, i32
  }
  func.func @transform_4(%arg0: i32) -> (i32, i32) {
    %c0_i32 = arith.constant 0 : i32
    %c0_i32_0 = arith.constant 0 : i32
    %c0_i32_1 = arith.constant 0 : i32
    return %c0_i32, %c0_i32_0 : i32, i32
  }
  func.func @transform_5(%arg0: i32) -> (i32, i32) {
    %c0_i32 = arith.constant 0 : i32
    %c0_i32_0 = arith.constant 0 : i32
    return %arg0, %c0_i32 : i32, i32
  }
}

</mosaic_0001>

<llo_original>
// kernel: mil_fc_forward.1
$region0: #{mil_fc_forward.1}
  #allocation0 [shape = 'u32[]', space=smem, size = 0x4, offset = 0x4, fixed_abs, tag = 'smem constant byte address 0x4 - core index']
  #allocation1 [shape = 'u32[144,128]{1,0:T(1,128)}', space=vmem, size = 0x12000, scoped, tag = 'internal scratch']
  %s0 = inlined_call_operand.hbm [shape: f32[40,1024], index: 0, kind: input, shape index: {}]
  %s1 = inlined_call_operand.hbm [shape: bf16[1024,512], index: 1, kind: input, shape index: {}]
  %s2 = inlined_call_operand.vmem [shape: f32[1,512], index: 2, kind: input, shape index: {}]
  %s3 = inlined_call_operand.hbm [shape: bf16[512,128], index: 3, kind: input, shape index: {}]
  %s4 = inlined_call_operand.vmem [shape: f32[1,128], index: 4, kind: input, shape index: {}]
  %s5 = inlined_call_operand.vmem [shape: bf16[40,128], index: 5, kind: output, shape index: {}]
  %s6 = sld [smem:[#allocation0]]
  $region109: #{mil_fc_forward.1} parent=0
    _
  %s8 = ssub.s32 1, %s6
  %s9 = scalar_select 0, %s8, %s6
  $region1: #{mil_fc_forward.1} parent=0
    #allocation2 [shape = 'u8[262144]{0}', space=vmem, size = 0x40000, scoped, tag = 'input window, operand 0']
    #allocation3 [shape = 's32[2]{0}', space=sflag, size = 0x8, scoped, tag = 'scoped memory for mil_fc_forward.1']
    #allocation4 [shape = 'u8[1048576]{0}', space=vmem, size = 0x100000, scoped, tag = 'input window, operand 1, single buffered']
    #allocation5 [shape = 's32[1]{0}', space=sflag, size = 0x4, scoped, tag = 'scoped memory for mil_fc_forward.1']
    #allocation6 [shape = 'u8[131072]{0}', space=vmem, size = 0x20000, scoped, tag = 'input window, operand 3, single buffered']
    #allocation7 [shape = 'u8[16384]{0}', space=vmem, size = 0x4000, scoped, tag = 'output window, operand 0']
    %10 = vsyncpa [#allocation3], 0
    %s11 = scalar_lea.sflag [#allocation3], 1
    %12 = vsyncpa %s11, 0
    %13 = vsyncpa [#allocation5], 0
    loop: start=0, step=1, limit=4
    $region2: #{mil_fc_forward.1} parent=1 // loop_pre_header
      _
    $region3: #{mil_fc_forward.1} parent=1 // loop_header
      %s15 = sphi 0, %s19
      %p16 = scmp.ge.s32.totalorder %s15, 4
      %s25 = sphi 0, %s27
      %s28 = sphi 0, %s25
      %s29 = sphi 0, %s28
      %s45 = sphi 0, %s29
      %s49 = sphi 0, %s49
      %s51 = sphi 0, %s49
      %s52 = sphi 0, %s51
      %s66 = sphi 0, %s52
      %s70 = sphi 0, %s70
      %s72 = sphi 0, %s70
      %s73 = sphi 0, %s72
      %s87 = sphi 0, %s73
      %s91 = sphi 0, %s91
      %s93 = sphi 0, %s91
      %s94 = sphi 0, %s93
      %s108 = sphi 0, %s94
      %s112 = sphi 0, %s112
      %s114 = sphi 0, %s112
      %s115 = sphi 0, %s114
      %s129 = sphi 0, %s115
      %s135 = sphi 0, %s137
      %s138 = sphi 0, %s135
      %s139 = sphi 0, %s138
      %s155 = sphi 0, %s139
    $region4: #{mil_fc_forward.1} parent=1 // loop_header_branch
      %18 = sbr.rel (%p16) target = $region8
    $region5: #{mil_fc_forward.1} parent=1 // loop_body
      %s20 = ssub.s32 %s15, 1
      %s21 = ssub.s32 %s15, 2
      %s22 = sadd.s32 %s15, 1
      %s23 = ssub.s32 %s15, %s22
      %p24 = scmp.eq.s32.totalorder %s23, 0
      %s26 = sadd.s32 %s25, 1
      %s27 = scalar_select %p24, %s25, %s26
      %p30 = pneg %p24
      %p31 = scmp.eq.s32.totalorder %s15, 1
      %p32 = por %p30, %p31
      %p33 = scmp.ne.s32.totalorder %s25, %s28
      %p34 = scmp.eq.s32.totalorder %s15, 0
      %p35 = por %p33, %p34
      %p36 = scmp.ne.s32.totalorder %s25, %s28
      %p37 = scmp.eq.s32.totalorder %s20, 1
      %p38 = por %p36, %p37
      %p39 = scmp.ne.s32.totalorder %s28, %s29
      %p40 = scmp.eq.s32.totalorder %s20, 0
      %p41 = por %p39, %p40
      %p42 = scmp.ne.s32.totalorder %s28, %s29
      %p43 = scmp.eq.s32.totalorder %s21, 1
      %p44 = por %p42, %p43
      %p46 = scmp.ne.s32.totalorder %s29, %s45
      %p47 = scmp.eq.s32.totalorder %s21, 0
      %p48 = por %p46, %p47
      %s50 = sadd.s32 %s49, 1
      %p53 = scmp.eq.s32.totalorder %s15, 1
      %p54 = scmp.ne.s32.totalorder %s49, %s51
      %p55 = scmp.eq.s32.totalorder %s15, 0
      %p56 = por %p54, %p55
      %p57 = scmp.ne.s32.totalorder %s49, %s51
      %p58 = scmp.eq.s32.totalorder %s20, 1
      %p59 = por %p57, %p58
      %p60 = scmp.ne.s32.totalorder %s51, %s52
      %p61 = scmp.eq.s32.totalorder %s20, 0
      %p62 = por %p60, %p61
      %p63 = scmp.ne.s32.totalorder %s51, %s52
      %p64 = scmp.eq.s32.totalorder %s21, 1
      %p65 = por %p63, %p64
      %p67 = scmp.ne.s32.totalorder %s52, %s66
      %p68 = scmp.eq.s32.totalorder %s21, 0
      %p69 = por %p67, %p68
      %s71 = sadd.s32 %s70, 1
      %p74 = scmp.eq.s32.totalorder %s15, 1
      %p75 = scmp.ne.s32.totalorder %s70, %s72
      %p76 = scmp.eq.s32.totalorder %s15, 0
      %p77 = por %p75, %p76
      %p78 = scmp.ne.s32.totalorder %s70, %s72
      %p79 = scmp.eq.s32.totalorder %s20, 1
      %p80 = por %p78, %p79
      %p81 = scmp.ne.s32.totalorder %s72, %s73
      %p82 = scmp.eq.s32.totalorder %s20, 0
      %p83 = por %p81, %p82
      %p84 = scmp.ne.s32.totalorder %s72, %s73
      %p85 = scmp.eq.s32.totalorder %s21, 1
      %p86 = por %p84, %p85
      %p88 = scmp.ne.s32.totalorder %s73, %s87
      %p89 = scmp.eq.s32.totalorder %s21, 0
      %p90 = por %p88, %p89
      %s92 = sadd.s32 %s91, 1
      %p95 = scmp.eq.s32.totalorder %s15, 1
      %p96 = scmp.ne.s32.totalorder %s91, %s93
      %p97 = scmp.eq.s32.totalorder %s15, 0
      %p98 = por %p96, %p97
      %p99 = scmp.ne.s32.totalorder %s91, %s93
      %p100 = scmp.eq.s32.totalorder %s20, 1
      %p101 = por %p99, %p100
      %p102 = scmp.ne.s32.totalorder %s93, %s94
      %p103 = scmp.eq.s32.totalorder %s20, 0
      %p104 = por %p102, %p103
      %p105 = scmp.ne.s32.totalorder %s93, %s94
      %p106 = scmp.eq.s32.totalorder %s21, 1
      %p107 = por %p105, %p106
      %p109 = scmp.ne.s32.totalorder %s94, %s108
      %p110 = scmp.eq.s32.totalorder %s21, 0
      %p111 = por %p109, %p110
      %s113 = sadd.s32 %s112, 1
      %p116 = scmp.eq.s32.totalorder %s15, 1
      %p117 = scmp.ne.s32.totalorder %s112, %s114
      %p118 = scmp.eq.s32.totalorder %s15, 0
      %p119 = por %p117, %p118
      %p120 = scmp.ne.s32.totalorder %s112, %s114
      %p121 = scmp.eq.s32.totalorder %s20, 1
      %p122 = por %p120, %p121
      %p123 = scmp.ne.s32.totalorder %s114, %s115
      %p124 = scmp.eq.s32.totalorder %s20, 0
      %p125 = por %p123, %p124
      %p126 = scmp.ne.s32.totalorder %s114, %s115
      %p127 = scmp.eq.s32.totalorder %s21, 1
      %p128 = por %p126, %p127
      %p130 = scmp.ne.s32.totalorder %s115, %s129
      %p131 = scmp.eq.s32.totalorder %s21, 0
      %p132 = por %p130, %p131
      %s133 = ssub.s32 %s15, %s22
      %p134 = scmp.eq.s32.totalorder %s133, 0
      %s136 = sadd.s32 %s135, 1
      %s137 = scalar_select %p134, %s135, %s136
      %p140 = pneg %p134
      %p141 = scmp.eq.s32.totalorder %s15, 1
      %p142 = por %p140, %p141
      %p143 = scmp.ne.s32.totalorder %s135, %s138
      %p144 = scmp.eq.s32.totalorder %s15, 0
      %p145 = por %p143, %p144
      %p146 = scmp.ne.s32.totalorder %s135, %s138
      %p147 = scmp.eq.s32.totalorder %s20, 1
      %p148 = por %p146, %p147
      %p149 = scmp.ne.s32.totalorder %s138, %s139
      %p150 = scmp.eq.s32.totalorder %s20, 0
      %p151 = por %p149, %p150
      %p152 = scmp.ne.s32.totalorder %s138, %s139
      %p153 = scmp.eq.s32.totalorder %s21, 1
      %p154 = por %p152, %p153
      %p156 = scmp.ne.s32.totalorder %s139, %s155
      %p157 = scmp.eq.s32.totalorder %s21, 0
      %p158 = por %p156, %p157
      %p159 = scmp.le.s32.totalorder 1, %s15
      %p160 = scmp.lt.s32.totalorder %s15, 3
      %p161 = pnand %p159, %p160
      %p162 = pneg %p161
      // Predicated region
      $region9: #{mil_fc_forward.1} parent=5 // pred_check
        _
      $region10: #{mil_fc_forward.1} parent=5 // pred_check_branch
        %164 = sbr.rel (%p161) target = $region12
      $region11: #{mil_fc_forward.1} parent=5 // pred_region
        %s165 = ssub.s32 %s15, 1
        // Predicated region
        $region13: #{mil_fc_forward.1} parent=11 // pred_check
          %p166 = pneg %p62
        $region14: #{mil_fc_forward.1} parent=11 // pred_check_branch
          %168 = sbr.rel (%p166) target = $region16
        $region15: #{mil_fc_forward.1} parent=11 // pred_region
          %s170 = ssub.s32 32768, 32768
          %171 = vsyncadd [#allocation5], %s170
          %s172 = sshll.u32 [#allocation4], 4
          %s173 = int_to_ptr.vmem [resolvable:$true] %s172
          %178 = dma.hbm_to_vmem [thread:$0]  %s1, 32768, %s173, [#allocation5], 256, 256, 16
        $region16: #{mil_fc_forward.1} parent=11 // pred_fallthru
          _
        // Predicated region
        $region17: #{mil_fc_forward.1} parent=11 // pred_check
          %p179 = pneg %p83
        $region18: #{mil_fc_forward.1} parent=11 // pred_check_branch
          %181 = sbr.rel (%p179) target = $region20
        $region19: #{mil_fc_forward.1} parent=11 // pred_region
          _
        $region20: #{mil_fc_forward.1} parent=11 // pred_fallthru
          _
        // Predicated region
        $region21: #{mil_fc_forward.1} parent=11 // pred_check
          %p182 = pneg %p104
        $region22: #{mil_fc_forward.1} parent=11 // pred_check_branch
          %184 = sbr.rel (%p182) target = $region24
        $region23: #{mil_fc_forward.1} parent=11 // pred_region
          %s186 = ssub.s32 4096, 4096
          %187 = vsyncadd [#allocation5], %s186
          %s188 = sshll.u32 [#allocation6], 4
          %s189 = int_to_ptr.vmem [resolvable:$true] %s188
          %194 = dma.hbm_to_vmem [thread:$0]  %s3, 4096, %s189, [#allocation5], 64, 64, 4
        $region24: #{mil_fc_forward.1} parent=11 // pred_fallthru
          _
        // Predicated region
        $region25: #{mil_fc_forward.1} parent=11 // pred_check
          %p195 = pneg %p125
        $region26: #{mil_fc_forward.1} parent=11 // pred_check_branch
          %197 = sbr.rel (%p195) target = $region28
        $region27: #{mil_fc_forward.1} parent=11 // pred_region
          _
        $region28: #{mil_fc_forward.1} parent=11 // pred_fallthru
          _
      $region12: #{mil_fc_forward.1} parent=5 // pred_fallthru
        _
      %p198 = scmp.lt.s32.totalorder %s15, 2
      // Predicated region
      $region29: #{mil_fc_forward.1} parent=5 // pred_check
        %p199 = pneg %p198
      $region30: #{mil_fc_forward.1} parent=5 // pred_check_branch
        %201 = sbr.rel (%p199) target = $region32
      $region31: #{mil_fc_forward.1} parent=5 // pred_region
        // Predicated region
        $region33: #{mil_fc_forward.1} parent=31 // pred_check
          %p202 = pneg %p35
        $region34: #{mil_fc_forward.1} parent=31 // pred_check_branch
          %204 = sbr.rel (%p202) target = $region36
        $region35: #{mil_fc_forward.1} parent=31 // pred_region
          %s205 = sand.u32 %s25, 1
          %s206 = scalar_lea.sflag [#allocation3], %s205
          %s207 = sand.u32 %s25, 1
          %s208 = smul.addr %s207, 256
          %s209 = scalar_lea.vmem [#allocation2], %s208
          %s210 = smul.u32 4, %s15
          %s211 = ssub.s32 5, %s210
          %p212 = scmp.lt.s32.totalorder %s211, 4
          %s213 = scalar_select %p212, %s211, 4
          %s214 = smul.u32 128, %s213
          %s215 = smul.u32 %s214, 8
          %s217 = ssub.s32 4096, %s215
          %218 = vsyncadd %s206, %s217
          %p219 = scmp.ne.s32.totalorder 0, %s215
          %s220 = smul.addr %s210, 8
          %s221 = smul.addr %s220, 128
          %s222 = scalar_lea.hbm %s0, %s221
          %s223 = smul.u32 64, %s213
          %s224 = sshll.u32 %s209, 4
          %s225 = int_to_ptr.vmem [resolvable:$true] %s224
          %s226 = sshll.u32 %s223, 4
          %230 = dma.hbm_to_vmem [thread:$0]  (%p219), %s222, %s226, %s225, %s206, 1024, 1024, 64
        $region36: #{mil_fc_forward.1} parent=31 // pred_fallthru
          _
      $region32: #{mil_fc_forward.1} parent=5 // pred_fallthru
        _
      %p231 = scmp.le.s32.totalorder 1, %s15
      %p232 = scmp.lt.s32.totalorder %s15, 3
      %p233 = pnand %p231, %p232
      %p234 = pneg %p233
      // Predicated region
      $region37: #{mil_fc_forward.1} parent=5 // pred_check
        _
      $region38: #{mil_fc_forward.1} parent=5 // pred_check_branch
        %236 = sbr.rel (%p233) target = $region40
      $region39: #{mil_fc_forward.1} parent=5 // pred_region
        %s237 = ssub.s32 %s15, 1
        %s238 = sand.u32 %s28, 1
        %s239 = scalar_lea.sflag [#allocation3], %s238
        %s240 = sand.u32 %s28, 1
        %s241 = smul.addr %s240, 256
        %s242 = scalar_lea.vmem [#allocation2], %s241
        // Predicated region
        $region41: #{mil_fc_forward.1} parent=39 // pred_check
          %p243 = pneg %p41
        $region42: #{mil_fc_forward.1} parent=39 // pred_check_branch
          %245 = sbr.rel (%p243) target = $region44
        $region43: #{mil_fc_forward.1} parent=39 // pred_region
          %246 = dma.done %s239, 4096
        $region44: #{mil_fc_forward.1} parent=39 // pred_fallthru
          _
        // Predicated region
        $region45: #{mil_fc_forward.1} parent=39 // pred_check
          %p247 = pneg %p62
        $region46: #{mil_fc_forward.1} parent=39 // pred_check_branch
          %249 = sbr.rel (%p247) target = $region48
        $region47: #{mil_fc_forward.1} parent=39 // pred_region
          %250 = dma.done [#allocation5], 32768
        $region48: #{mil_fc_forward.1} parent=39 // pred_fallthru
          _
        // Predicated region
        $region49: #{mil_fc_forward.1} parent=39 // pred_check
          %p251 = pneg %p104
        $region50: #{mil_fc_forward.1} parent=39 // pred_check_branch
          %253 = sbr.rel (%p251) target = $region52
        $region51: #{mil_fc_forward.1} parent=39 // pred_region
          %254 = dma.done [#allocation5], 4096
        $region52: #{mil_fc_forward.1} parent=39 // pred_fallthru
          _
        %s255 = sand.u32 %s28, 1
        %s256 = scalar_lea.sflag [#allocation3], %s255
        %s257 = sand.u32 %s28, 1
        %s258 = smul.addr %s257, 256
        %s259 = scalar_lea.vmem [#allocation2], %s258
        %p260 = pneg %p41
        %p261 = pneg %p38
        %p262 = pneg %p62
        %p263 = pneg %p59
        %p264 = pneg %p83
        %p265 = pneg %p80
        %p266 = pneg %p104
        %p267 = pneg %p101
        %p268 = pneg %p125
        %p269 = pneg %p122
        %p270 = pneg %p151
        %p271 = pneg %p148
        %s272 = sand.u32 %s138, 1
        %s273 = sand.u32 %s138, 1
        %s274 = smul.addr %s273, 16
        %s275 = scalar_lea.vmem [#allocation7], %s274
        %s276 = smul.u32 4, %s20
        %s277 = ssub.s32 5, %s276
        %p278 = scmp.lt.s32.totalorder %s277, 4
        %s279 = scalar_select %p278, %s277, 4
        %s280 = smul.u32 128, %s279
        %s281 = smul.u32 %s280, 8
        %s282 = smul.u32 4, %s20
        %s283 = ssub.s32 5, %s282
        %p284 = scmp.lt.s32.totalorder %s283, 4
        %s285 = scalar_select %p284, %s283, 4
        %s286 = smul.u32 64, %s285
        %v288 = vld [vmem:[%s242] sm:$0xff]
        %v289 = vld [vmem:[%s242 + $0x8] sm:$0xff]
        %v290 = vld [vmem:[%s242 + $0x10] sm:$0xff]
        %v291 = vld [vmem:[%s242 + $0x18] sm:$0xff]
        %v292 = vld [vmem:[%s242 + $0x20] sm:$0xff]
        %v293 = vld [vmem:[%s242 + $0x28] sm:$0xff]
        %v294 = vld [vmem:[%s242 + $0x30] sm:$0xff]
        %v295 = vld [vmem:[%s242 + $0x38] sm:$0xff]
        %v296 = vld [vmem:[%s242 + $0x40] sm:$0xff]
        %v297 = vld [vmem:[%s242 + $0x48] sm:$0xff]
        %v298 = vld [vmem:[%s242 + $0x50] sm:$0xff]
        %v299 = vld [vmem:[%s242 + $0x58] sm:$0xff]
        %v300 = vld [vmem:[%s242 + $0x60] sm:$0xff]
        %v301 = vld [vmem:[%s242 + $0x68] sm:$0xff]
        %v302 = vld [vmem:[%s242 + $0x70] sm:$0xff]
        %v303 = vld [vmem:[%s242 + $0x78] sm:$0xff]
        %v304 = vld [vmem:[%s242 + $0x80] sm:$0xff]
        %v305 = vld [vmem:[%s242 + $0x88] sm:$0xff]
        %v306 = vld [vmem:[%s242 + $0x90] sm:$0xff]
        %v307 = vld [vmem:[%s242 + $0x98] sm:$0xff]
        %v308 = vld [vmem:[%s242 + $0xa0] sm:$0xff]
        %v309 = vld [vmem:[%s242 + $0xa8] sm:$0xff]
        %v310 = vld [vmem:[%s242 + $0xb0] sm:$0xff]
        %v311 = vld [vmem:[%s242 + $0xb8] sm:$0xff]
        %v312 = vld [vmem:[%s242 + $0xc0] sm:$0xff]
        %v313 = vld [vmem:[%s242 + $0xc8] sm:$0xff]
        %v314 = vld [vmem:[%s242 + $0xd0] sm:$0xff]
        %v315 = vld [vmem:[%s242 + $0xd8] sm:$0xff]
        %v316 = vld [vmem:[%s242 + $0xe0] sm:$0xff]
        %v317 = vld [vmem:[%s242 + $0xe8] sm:$0xff]
        %v318 = vld [vmem:[%s242 + $0xf0] sm:$0xff]
        %v319 = vld [vmem:[%s242 + $0xf8] sm:$0xff]
        %v320 = vpack.c.bf16 %v296, %v288
        %v321 = vpack.c.bf16 %v297, %v289
        %v322 = vpack.c.bf16 %v298, %v290
        %v323 = vpack.c.bf16 %v299, %v291
        %v324 = vpack.c.bf16 %v300, %v292
        %v325 = vpack.c.bf16 %v301, %v293
        %v326 = vpack.c.bf16 %v302, %v294
        %v327 = vpack.c.bf16 %v303, %v295
        %v328 = vpack.c.bf16 %v312, %v304
        %v329 = vpack.c.bf16 %v313, %v305
        %v330 = vpack.c.bf16 %v314, %v306
        %v331 = vpack.c.bf16 %v315, %v307
        %v332 = vpack.c.bf16 %v316, %v308
        %v333 = vpack.c.bf16 %v317, %v309
        %v334 = vpack.c.bf16 %v318, %v310
        %v335 = vpack.c.bf16 %v319, %v311
        %v336 = vld [vmem:[#allocation4] sm:$0xff]
        %v337 = vld [vmem:[#allocation4 + $0x8] sm:$0xff]
        %v338 = vld [vmem:[#allocation4 + $0x10] sm:$0xff]
        %v339 = vld [vmem:[#allocation4 + $0x18] sm:$0xff]
        %v340 = vld [vmem:[#allocation4 + $0x20] sm:$0xff]
        %v341 = vld [vmem:[#allocation4 + $0x28] sm:$0xff]
        %v342 = vld [vmem:[#allocation4 + $0x30] sm:$0xff]
        %v343 = vld [vmem:[#allocation4 + $0x38] sm:$0xff]
        %v344 = vld [vmem:[#allocation4 + $0x40] sm:$0xff]
        %v345 = vld [vmem:[#allocation4 + $0x48] sm:$0xff]
        %v346 = vld [vmem:[#allocation4 + $0x50] sm:$0xff]
        %v347 = vld [vmem:[#allocation4 + $0x58] sm:$0xff]
        %v348 = vld [vmem:[#allocation4 + $0x60] sm:$0xff]
        %v349 = vld [vmem:[#allocation4 + $0x68] sm:$0xff]
        %v350 = vld [vmem:[#allocation4 + $0x70] sm:$0xff]
        %v351 = vld [vmem:[#allocation4 + $0x78] sm:$0xff]
        %v352 = vld [vmem:[#allocation4 + $0x80] sm:$0xff]
        %v353 = vld [vmem:[#allocation4 + $0x88] sm:$0xff]
        %v354 = vld [vmem:[#allocation4 + $0x90] sm:$0xff]
        %v355 = vld [vmem:[#allocation4 + $0x98] sm:$0xff]
        %v356 = vld [vmem:[#allocation4 + $0xa0] sm:$0xff]
        %v357 = vld [vmem:[#allocation4 + $0xa8] sm:$0xff]
        %v358 = vld [vmem:[#allocation4 + $0xb0] sm:$0xff]
        %v359 = vld [vmem:[#allocation4 + $0xb8] sm:$0xff]
        %v360 = vld [vmem:[#allocation4 + $0xc0] sm:$0xff]
        %v361 = vld [vmem:[#allocation4 + $0xc8] sm:$0xff]
        %v362 = vld [vmem:[#allocation4 + $0xd0] sm:$0xff]
        %v363 = vld [vmem:[#allocation4 + $0xd8] sm:$0xff]
        %v364 = vld [vmem:[#allocation4 + $0xe0] sm:$0xff]
        %v365 = vld [vmem:[#allocation4 + $0xe8] sm:$0xff]
        %v366 = vld [vmem:[#allocation4 + $0xf0] sm:$0xff]
        %v367 = vld [vmem:[#allocation4 + $0xf8] sm:$0xff]
        %v368 = vld [vmem:[#allocation4 + $0x100] sm:$0xff]
        %v369 = vld [vmem:[#allocation4 + $0x108] sm:$0xff]
        %v370 = vld [vmem:[#allocation4 + $0x110] sm:$0xff]
        %v371 = vld [vmem:[#allocation4 + $0x118] sm:$0xff]
        %v372 = vld [vmem:[#allocation4 + $0x120] sm:$0xff]
        %v373 = vld [vmem:[#allocation4 + $0x128] sm:$0xff]
        %v374 = vld [vmem:[#allocation4 + $0x130] sm:$0xff]
        %v375 = vld [vmem:[#allocation4 + $0x138] sm:$0xff]
        %v376 = vld [vmem:[#allocation4 + $0x140] sm:$0xff]
        %v377 = vld [vmem:[#allocation4 + $0x148] sm:$0xff]
        %v378 = vld [vmem:[#allocation4 + $0x150] sm:$0xff]
        %v379 = vld [vmem:[#allocation4 + $0x158] sm:$0xff]
        %v380 = vld [vmem:[#allocation4 + $0x160] sm:$0xff]
        %v381 = vld [vmem:[#allocation4 + $0x168] sm:$0xff]
        %v382 = vld [vmem:[#allocation4 + $0x170] sm:$0xff]
        %v383 = vld [vmem:[#allocation4 + $0x178] sm:$0xff]
        %v384 = vld [vmem:[#allocation4 + $0x180] sm:$0xff]
        %v385 = vld [vmem:[#allocation4 + $0x188] sm:$0xff]
        %v386 = vld [vmem:[#allocation4 + $0x190] sm:$0xff]
        %v387 = vld [vmem:[#allocation4 + $0x198] sm:$0xff]
        %v388 = vld [vmem:[#allocation4 + $0x1a0] sm:$0xff]
        %v389 = vld [vmem:[#allocation4 + $0x1a8] sm:$0xff]
        %v390 = vld [vmem:[#allocation4 + $0x1b0] sm:$0xff]
        %v391 = vld [vmem:[#allocation4 + $0x1b8] sm:$0xff]
        %v392 = vld [vmem:[#allocation4 + $0x1c0] sm:$0xff]
        %v393 = vld [vmem:[#allocation4 + $0x1c8] sm:$0xff]
        %v394 = vld [vmem:[#allocation4 + $0x1d0] sm:$0xff]
        %v395 = vld [vmem:[#allocation4 + $0x1d8] sm:$0xff]
        %v396 = vld [vmem:[#allocation4 + $0x1e0] sm:$0xff]
        %v397 = vld [vmem:[#allocation4 + $0x1e8] sm:$0xff]
        %v398 = vld [vmem:[#allocation4 + $0x1f0] sm:$0xff]
        %v399 = vld [vmem:[#allocation4 + $0x1f8] sm:$0xff]
        %v400 = vld [vmem:[#allocation4 + $0x200] sm:$0xff]
        %v401 = vld [vmem:[#allocation4 + $0x208] sm:$0xff]
        %v402 = vld [vmem:[#allocation4 + $0x210] sm:$0xff]
        %v403 = vld [vmem:[#allocation4 + $0x218] sm:$0xff]
        %v404 = vld [vmem:[#allocation4 + $0x220] sm:$0xff]
        %v405 = vld [vmem:[#allocation4 + $0x228] sm:$0xff]
        %v406 = vld [vmem:[#allocation4 + $0x230] sm:$0xff]
        %v407 = vld [vmem:[#allocation4 + $0x238] sm:$0xff]
        %v408 = vld [vmem:[#allocation4 + $0x240] sm:$0xff]
        %v409 = vld [vmem:[#allocation4 + $0x248] sm:$0xff]
        %v410 = vld [vmem:[#allocation4 + $0x250] sm:$0xff]
        %v411 = vld [vmem:[#allocation4 + $0x258] sm:$0xff]
        %v412 = vld [vmem:[#allocation4 + $0x260] sm:$0xff]
        %v413 = vld [vmem:[#allocation4 + $0x268] sm:$0xff]
        %v414 = vld [vmem:[#allocation4 + $0x270] sm:$0xff]
        %v415 = vld [vmem:[#allocation4 + $0x278] sm:$0xff]
        %v416 = vld [vmem:[#allocation4 + $0x280] sm:$0xff]
        %v417 = vld [vmem:[#allocation4 + $0x288] sm:$0xff]
        %v418 = vld [vmem:[#allocation4 + $0x290] sm:$0xff]
        %v419 = vld [vmem:[#allocation4 + $0x298] sm:$0xff]
        %v420 = vld [vmem:[#allocation4 + $0x2a0] sm:$0xff]
        %v421 = vld [vmem:[#allocation4 + $0x2a8] sm:$0xff]
        %v422 = vld [vmem:[#allocation4 + $0x2b0] sm:$0xff]
        %v423 = vld [vmem:[#allocation4 + $0x2b8] sm:$0xff]
        %v424 = vld [vmem:[#allocation4 + $0x2c0] sm:$0xff]
        %v425 = vld [vmem:[#allocation4 + $0x2c8] sm:$0xff]
        %v426 = vld [vmem:[#allocation4 + $0x2d0] sm:$0xff]
        %v427 = vld [vmem:[#allocation4 + $0x2d8] sm:$0xff]
        %v428 = vld [vmem:[#allocation4 + $0x2e0] sm:$0xff]
        %v429 = vld [vmem:[#allocation4 + $0x2e8] sm:$0xff]
        %v430 = vld [vmem:[#allocation4 + $0x2f0] sm:$0xff]
        %v431 = vld [vmem:[#allocation4 + $0x2f8] sm:$0xff]
        %v432 = vld [vmem:[#allocation4 + $0x300] sm:$0xff]
        %v433 = vld [vmem:[#allocation4 + $0x308] sm:$0xff]
        %v434 = vld [vmem:[#allocation4 + $0x310] sm:$0xff]
        %v435 = vld [vmem:[#allocation4 + $0x318] sm:$0xff]
        %v436 = vld [vmem:[#allocation4 + $0x320] sm:$0xff]
        %v437 = vld [vmem:[#allocation4 + $0x328] sm:$0xff]
        %v438 = vld [vmem:[#allocation4 + $0x330] sm:$0xff]
        %v439 = vld [vmem:[#allocation4 + $0x338] sm:$0xff]
        %v440 = vld [vmem:[#allocation4 + $0x340] sm:$0xff]
        %v441 = vld [vmem:[#allocation4 + $0x348] sm:$0xff]
        %v442 = vld [vmem:[#allocation4 + $0x350] sm:$0xff]
        %v443 = vld [vmem:[#allocation4 + $0x358] sm:$0xff]
        %v444 = vld [vmem:[#allocation4 + $0x360] sm:$0xff]
        %v445 = vld [vmem:[#allocation4 + $0x368] sm:$0xff]
        %v446 = vld [vmem:[#allocation4 + $0x370] sm:$0xff]
        %v447 = vld [vmem:[#allocation4 + $0x378] sm:$0xff]
        %v448 = vld [vmem:[#allocation4 + $0x380] sm:$0xff]
        %v449 = vld [vmem:[#allocation4 + $0x388] sm:$0xff]
        %v450 = vld [vmem:[#allocation4 + $0x390] sm:$0xff]
        %v451 = vld [vmem:[#allocation4 + $0x398] sm:$0xff]
        %v452 = vld [vmem:[#allocation4 + $0x3a0] sm:$0xff]
        %v453 = vld [vmem:[#allocation4 + $0x3a8] sm:$0xff]
        %v454 = vld [vmem:[#allocation4 + $0x3b0] sm:$0xff]
        %v455 = vld [vmem:[#allocation4 + $0x3b8] sm:$0xff]
        %v456 = vld [vmem:[#allocation4 + $0x3c0] sm:$0xff]
        %v457 = vld [vmem:[#allocation4 + $0x3c8] sm:$0xff]
        %v458 = vld [vmem:[#allocation4 + $0x3d0] sm:$0xff]
        %v459 = vld [vmem:[#allocation4 + $0x3d8] sm:$0xff]
        %v460 = vld [vmem:[#allocation4 + $0x3e0] sm:$0xff]
        %v461 = vld [vmem:[#allocation4 + $0x3e8] sm:$0xff]
        %v462 = vld [vmem:[#allocation4 + $0x3f0] sm:$0xff]
        %v463 = vld [vmem:[#allocation4 + $0x3f8] sm:$0xff]
        %v464 = vld [vmem:[#allocation4 + $0x400] sm:$0xff]
        %v465 = vld [vmem:[#allocation4 + $0x408] sm:$0xff]
        %v466 = vld [vmem:[#allocation4 + $0x410] sm:$0xff]
        %v467 = vld [vmem:[#allocation4 + $0x418] sm:$0xff]
        %v468 = vld [vmem:[#allocation4 + $0x420] sm:$0xff]
        %v469 = vld [vmem:[#allocation4 + $0x428] sm:$0xff]
        %v470 = vld [vmem:[#allocation4 + $0x430] sm:$0xff]
        %v471 = vld [vmem:[#allocation4 + $0x438] sm:$0xff]
        %v472 = vld [vmem:[#allocation4 + $0x440] sm:$0xff]
        %v473 = vld [vmem:[#allocation4 + $0x448] sm:$0xff]
        %v474 = vld [vmem:[#allocation4 + $0x450] sm:$0xff]
        %v475 = vld [vmem:[#allocation4 + $0x458] sm:$0xff]
        %v476 = vld [vmem:[#allocation4 + $0x460] sm:$0xff]
        %v477 = vld [vmem:[#allocation4 + $0x468] sm:$0xff]
        %v478 = vld [vmem:[#allocation4 + $0x470] sm:$0xff]
        %v479 = vld [vmem:[#allocation4 + $0x478] sm:$0xff]
        %v480 = vld [vmem:[#allocation4 + $0x480] sm:$0xff]
        %v481 = vld [vmem:[#allocation4 + $0x488] sm:$0xff]
        %v482 = vld [vmem:[#allocation4 + $0x490] sm:$0xff]
        %v483 = vld [vmem:[#allocation4 + $0x498] sm:$0xff]
        %v484 = vld [vmem:[#allocation4 + $0x4a0] sm:$0xff]
        %v485 = vld [vmem:[#allocation4 + $0x4a8] sm:$0xff]
        %v486 = vld [vmem:[#allocation4 + $0x4b0] sm:$0xff]
        %v487 = vld [vmem:[#allocation4 + $0x4b8] sm:$0xff]
        %v488 = vld [vmem:[#allocation4 + $0x4c0] sm:$0xff]
        %v489 = vld [vmem:[#allocation4 + $0x4c8] sm:$0xff]
        %v490 = vld [vmem:[#allocation4 + $0x4d0] sm:$0xff]
        %v491 = vld [vmem:[#allocation4 + $0x4d8] sm:$0xff]
        %v492 = vld [vmem:[#allocation4 + $0x4e0] sm:$0xff]
        %v493 = vld [vmem:[#allocation4 + $0x4e8] sm:$0xff]
        %v494 = vld [vmem:[#allocation4 + $0x4f0] sm:$0xff]
        %v495 = vld [vmem:[#allocation4 + $0x4f8] sm:$0xff]
        %v496 = vld [vmem:[#allocation4 + $0x500] sm:$0xff]
        %v497 = vld [vmem:[#allocation4 + $0x508] sm:$0xff]
        %v498 = vld [vmem:[#allocation4 + $0x510] sm:$0xff]
        %v499 = vld [vmem:[#allocation4 + $0x518] sm:$0xff]
        %v500 = vld [vmem:[#allocation4 + $0x520] sm:$0xff]
        %v501 = vld [vmem:[#allocation4 + $0x528] sm:$0xff]
        %v502 = vld [vmem:[#allocation4 + $0x530] sm:$0xff]
        %v503 = vld [vmem:[#allocation4 + $0x538] sm:$0xff]
        %v504 = vld [vmem:[#allocation4 + $0x540] sm:$0xff]
        %v505 = vld [vmem:[#allocation4 + $0x548] sm:$0xff]
        %v506 = vld [vmem:[#allocation4 + $0x550] sm:$0xff]
        %v507 = vld [vmem:[#allocation4 + $0x558] sm:$0xff]
        %v508 = vld [vmem:[#allocation4 + $0x560] sm:$0xff]
        %v509 = vld [vmem:[#allocation4 + $0x568] sm:$0xff]
        %v510 = vld [vmem:[#allocation4 + $0x570] sm:$0xff]
        %v511 = vld [vmem:[#allocation4 + $0x578] sm:$0xff]
        %v512 = vld [vmem:[#allocation4 + $0x580] sm:$0xff]
        %v513 = vld [vmem:[#allocation4 + $0x588] sm:$0xff]
        %v514 = vld [vmem:[#allocation4 + $0x590] sm:$0xff]
        %v515 = vld [vmem:[#allocation4 + $0x598] sm:$0xff]
        %v516 = vld [vmem:[#allocation4 + $0x5a0] sm:$0xff]
        %v517 = vld [vmem:[#allocation4 + $0x5a8] sm:$0xff]
        %v518 = vld [vmem:[#allocation4 + $0x5b0] sm:$0xff]
        %v519 = vld [vmem:[#allocation4 + $0x5b8] sm:$0xff]
        %v520 = vld [vmem:[#allocation4 + $0x5c0] sm:$0xff]
        %v521 = vld [vmem:[#allocation4 + $0x5c8] sm:$0xff]
        %v522 = vld [vmem:[#allocation4 + $0x5d0] sm:$0xff]
        %v523 = vld [vmem:[#allocation4 + $0x5d8] sm:$0xff]
        %v524 = vld [vmem:[#allocation4 + $0x5e0] sm:$0xff]
        %v525 = vld [vmem:[#allocation4 + $0x5e8] sm:$0xff]
        %v526 = vld [vmem:[#allocation4 + $0x5f0] sm:$0xff]
        %v527 = vld [vmem:[#allocation4 + $0x5f8] sm:$0xff]
        %v528 = vld [vmem:[#allocation4 + $0x600] sm:$0xff]
        %v529 = vld [vmem:[#allocation4 + $0x608] sm:$0xff]
        %v530 = vld [vmem:[#allocation4 + $0x610] sm:$0xff]
        %v531 = vld [vmem:[#allocation4 + $0x618] sm:$0xff]
        %v532 = vld [vmem:[#allocation4 + $0x620] sm:$0xff]
        %v533 = vld [vmem:[#allocation4 + $0x628] sm:$0xff]
        %v534 = vld [vmem:[#allocation4 + $0x630] sm:$0xff]
        %v535 = vld [vmem:[#allocation4 + $0x638] sm:$0xff]
        %v536 = vld [vmem:[#allocation4 + $0x640] sm:$0xff]
        %v537 = vld [vmem:[#allocation4 + $0x648] sm:$0xff]
        %v538 = vld [vmem:[#allocation4 + $0x650] sm:$0xff]
        %v539 = vld [vmem:[#allocation4 + $0x658] sm:$0xff]
        %v540 = vld [vmem:[#allocation4 + $0x660] sm:$0xff]
        %v541 = vld [vmem:[#allocation4 + $0x668] sm:$0xff]
        %v542 = vld [vmem:[#allocation4 + $0x670] sm:$0xff]
        %v543 = vld [vmem:[#allocation4 + $0x678] sm:$0xff]
        %v544 = vld [vmem:[#allocation4 + $0x680] sm:$0xff]
        %v545 = vld [vmem:[#allocation4 + $0x688] sm:$0xff]
        %v546 = vld [vmem:[#allocation4 + $0x690] sm:$0xff]
        %v547 = vld [vmem:[#allocation4 + $0x698] sm:$0xff]
        %v548 = vld [vmem:[#allocation4 + $0x6a0] sm:$0xff]
        %v549 = vld [vmem:[#allocation4 + $0x6a8] sm:$0xff]
        %v550 = vld [vmem:[#allocation4 + $0x6b0] sm:$0xff]
        %v551 = vld [vmem:[#allocation4 + $0x6b8] sm:$0xff]
        %v552 = vld [vmem:[#allocation4 + $0x6c0] sm:$0xff]
        %v553 = vld [vmem:[#allocation4 + $0x6c8] sm:$0xff]
        %v554 = vld [vmem:[#allocation4 + $0x6d0] sm:$0xff]
        %v555 = vld [vmem:[#allocation4 + $0x6d8] sm:$0xff]
        %v556 = vld [vmem:[#allocation4 + $0x6e0] sm:$0xff]
        %v557 = vld [vmem:[#allocation4 + $0x6e8] sm:$0xff]
        %v558 = vld [vmem:[#allocation4 + $0x6f0] sm:$0xff]
        %v559 = vld [vmem:[#allocation4 + $0x6f8] sm:$0xff]
        %v560 = vld [vmem:[#allocation4 + $0x700] sm:$0xff]
        %v561 = vld [vmem:[#allocation4 + $0x708] sm:$0xff]
        %v562 = vld [vmem:[#allocation4 + $0x710] sm:$0xff]
        %v563 = vld [vmem:[#allocation4 + $0x718] sm:$0xff]
        %v564 = vld [vmem:[#allocation4 + $0x720] sm:$0xff]
        %v565 = vld [vmem:[#allocation4 + $0x728] sm:$0xff]
        %v566 = vld [vmem:[#allocation4 + $0x730] sm:$0xff]
        %v567 = vld [vmem:[#allocation4 + $0x738] sm:$0xff]
        %v568 = vld [vmem:[#allocation4 + $0x740] sm:$0xff]
        %v569 = vld [vmem:[#allocation4 + $0x748] sm:$0xff]
        %v570 = vld [vmem:[#allocation4 + $0x750] sm:$0xff]
        %v571 = vld [vmem:[#allocation4 + $0x758] sm:$0xff]
        %v572 = vld [vmem:[#allocation4 + $0x760] sm:$0xff]
        %v573 = vld [vmem:[#allocation4 + $0x768] sm:$0xff]
        %v574 = vld [vmem:[#allocation4 + $0x770] sm:$0xff]
        %v575 = vld [vmem:[#allocation4 + $0x778] sm:$0xff]
        %v576 = vld [vmem:[#allocation4 + $0x780] sm:$0xff]
        %v577 = vld [vmem:[#allocation4 + $0x788] sm:$0xff]
        %v578 = vld [vmem:[#allocation4 + $0x790] sm:$0xff]
        %v579 = vld [vmem:[#allocation4 + $0x798] sm:$0xff]
        %v580 = vld [vmem:[#allocation4 + $0x7a0] sm:$0xff]
        %v581 = vld [vmem:[#allocation4 + $0x7a8] sm:$0xff]
        %v582 = vld [vmem:[#allocation4 + $0x7b0] sm:$0xff]
        %v583 = vld [vmem:[#allocation4 + $0x7b8] sm:$0xff]
        %v584 = vld [vmem:[#allocation4 + $0x7c0] sm:$0xff]
        %v585 = vld [vmem:[#allocation4 + $0x7c8] sm:$0xff]
        %v586 = vld [vmem:[#allocation4 + $0x7d0] sm:$0xff]
        %v587 = vld [vmem:[#allocation4 + $0x7d8] sm:$0xff]
        %v588 = vld [vmem:[#allocation4 + $0x7e0] sm:$0xff]
        %v589 = vld [vmem:[#allocation4 + $0x7e8] sm:$0xff]
        %v590 = vld [vmem:[#allocation4 + $0x7f0] sm:$0xff]
        %v591 = vld [vmem:[#allocation4 + $0x7f8] sm:$0xff]
        %v592 = vld [vmem:[%s2] sm:$0xf]
        %v594 = vlaneseq
        %v595 = vshrl.u32 %v594, 7
        %v596 = vsub.s32 0, %v595
        %v597 = vrot.slane %v592, %v596
        %v598 = vlaneseq
        %v599 = vshrl.u32 %v598, 7
        %v600 = vsub.s32 1, %v599
        %v601 = vrot.slane %v592, %v600
        %v602 = vlaneseq
        %v603 = vshrl.u32 %v602, 7
        %v604 = vsub.s32 2, %v603
        %v605 = vrot.slane %v592, %v604
        %v606 = vlaneseq
        %v607 = vshrl.u32 %v606, 7
        %v608 = vsub.s32 3, %v607
        %v609 = vrot.slane %v592, %v608
        %v870 = vunpack.c.l.b16 %v336
        %v871 = vunpack.c.h.b16 %v336
        %v872 = vunpack.c.l.b16 %v337
        %v873 = vunpack.c.h.b16 %v337
        %v874 = vunpack.c.l.b16 %v338
        %v875 = vunpack.c.h.b16 %v338
        %v876 = vunpack.c.l.b16 %v339
        %v877 = vunpack.c.h.b16 %v339
        %v878 = vunpack.c.l.b16 %v340
        %v879 = vunpack.c.h.b16 %v340
        %v880 = vunpack.c.l.b16 %v341
        %v881 = vunpack.c.h.b16 %v341
        %v882 = vunpack.c.l.b16 %v342
        %v883 = vunpack.c.h.b16 %v342
        %v884 = vunpack.c.l.b16 %v343
        %v885 = vunpack.c.h.b16 %v343
        %v886 = vunpack.c.l.b16 %v344
        %v887 = vunpack.c.h.b16 %v344
        %v888 = vunpack.c.l.b16 %v345
        %v889 = vunpack.c.h.b16 %v345
        %v890 = vunpack.c.l.b16 %v346
        %v891 = vunpack.c.h.b16 %v346
        %v892 = vunpack.c.l.b16 %v347
        %v893 = vunpack.c.h.b16 %v347
        %v894 = vunpack.c.l.b16 %v348
        %v895 = vunpack.c.h.b16 %v348
        %v896 = vunpack.c.l.b16 %v349
        %v897 = vunpack.c.h.b16 %v349
        %v898 = vunpack.c.l.b16 %v350
        %v899 = vunpack.c.h.b16 %v350
        %v900 = vunpack.c.l.b16 %v351
        %v901 = vunpack.c.h.b16 %v351
        %v902 = vunpack.c.l.b16 %v352
        %v903 = vunpack.c.h.b16 %v352
        %v904 = vunpack.c.l.b16 %v353
        %v905 = vunpack.c.h.b16 %v353
        %v906 = vunpack.c.l.b16 %v354
        %v907 = vunpack.c.h.b16 %v354
        %v908 = vunpack.c.l.b16 %v355
        %v909 = vunpack.c.h.b16 %v355
        %v910 = vunpack.c.l.b16 %v356
        %v911 = vunpack.c.h.b16 %v356
        %v912 = vunpack.c.l.b16 %v357
        %v913 = vunpack.c.h.b16 %v357
        %v914 = vunpack.c.l.b16 %v358
        %v915 = vunpack.c.h.b16 %v358
        %v916 = vunpack.c.l.b16 %v359
        %v917 = vunpack.c.h.b16 %v359
        %v918 = vunpack.c.l.b16 %v360
        %v919 = vunpack.c.h.b16 %v360
        %v920 = vunpack.c.l.b16 %v361
        %v921 = vunpack.c.h.b16 %v361
        %v922 = vunpack.c.l.b16 %v362
        %v923 = vunpack.c.h.b16 %v362
        %v924 = vunpack.c.l.b16 %v363
        %v925 = vunpack.c.h.b16 %v363
        %v926 = vunpack.c.l.b16 %v364
        %v927 = vunpack.c.h.b16 %v364
        %v928 = vunpack.c.l.b16 %v365
        %v929 = vunpack.c.h.b16 %v365
        %v930 = vunpack.c.l.b16 %v366
        %v931 = vunpack.c.h.b16 %v366
        %v932 = vunpack.c.l.b16 %v367
        %v933 = vunpack.c.h.b16 %v367
        %v934 = vunpack.c.l.b16 %v368
        %v935 = vunpack.c.h.b16 %v368
        %v936 = vunpack.c.l.b16 %v369
        %v937 = vunpack.c.h.b16 %v369
        %v938 = vunpack.c.l.b16 %v370
        %v939 = vunpack.c.h.b16 %v370
        %v940 = vunpack.c.l.b16 %v371
        %v941 = vunpack.c.h.b16 %v371
        %v942 = vunpack.c.l.b16 %v372
        %v943 = vunpack.c.h.b16 %v372
        %v944 = vunpack.c.l.b16 %v373
        %v945 = vunpack.c.h.b16 %v373
        %v946 = vunpack.c.l.b16 %v374
        %v947 = vunpack.c.h.b16 %v374
        %v948 = vunpack.c.l.b16 %v375
        %v949 = vunpack.c.h.b16 %v375
        %v950 = vunpack.c.l.b16 %v376
        %v951 = vunpack.c.h.b16 %v376
        %v952 = vunpack.c.l.b16 %v377
        %v953 = vunpack.c.h.b16 %v377
        %v954 = vunpack.c.l.b16 %v378
        %v955 = vunpack.c.h.b16 %v378
        %v956 = vunpack.c.l.b16 %v379
        %v957 = vunpack.c.h.b16 %v379
        %v958 = vunpack.c.l.b16 %v380
        %v959 = vunpack.c.h.b16 %v380
        %v960 = vunpack.c.l.b16 %v381
        %v961 = vunpack.c.h.b16 %v381
        %v962 = vunpack.c.l.b16 %v382
        %v963 = vunpack.c.h.b16 %v382
        %v964 = vunpack.c.l.b16 %v383
        %v965 = vunpack.c.h.b16 %v383
        %v966 = vunpack.c.l.b16 %v384
        %v967 = vunpack.c.h.b16 %v384
        %v968 = vunpack.c.l.b16 %v385
        %v969 = vunpack.c.h.b16 %v385
        %v970 = vunpack.c.l.b16 %v386
        %v971 = vunpack.c.h.b16 %v386
        %v972 = vunpack.c.l.b16 %v387
        %v973 = vunpack.c.h.b16 %v387
        %v974 = vunpack.c.l.b16 %v388
        %v975 = vunpack.c.h.b16 %v388
        %v976 = vunpack.c.l.b16 %v389
        %v977 = vunpack.c.h.b16 %v389
        %v978 = vunpack.c.l.b16 %v390
        %v979 = vunpack.c.h.b16 %v390
        %v980 = vunpack.c.l.b16 %v391
        %v981 = vunpack.c.h.b16 %v391
        %v982 = vunpack.c.l.b16 %v392
        %v983 = vunpack.c.h.b16 %v392
        %v984 = vunpack.c.l.b16 %v393
        %v985 = vunpack.c.h.b16 %v393
        %v986 = vunpack.c.l.b16 %v394
        %v987 = vunpack.c.h.b16 %v394
        %v988 = vunpack.c.l.b16 %v395
        %v989 = vunpack.c.h.b16 %v395
        %v990 = vunpack.c.l.b16 %v396
        %v991 = vunpack.c.h.b16 %v396
        %v992 = vunpack.c.l.b16 %v397
        %v993 = vunpack.c.h.b16 %v397
        %v994 = vunpack.c.l.b16 %v398
        %v995 = vunpack.c.h.b16 %v398
        %v996 = vunpack.c.l.b16 %v399
        %v997 = vunpack.c.h.b16 %v399
        %v998 = vunpack.c.l.b16 %v400
        %v999 = vunpack.c.h.b16 %v400
        %v1000 = vunpack.c.l.b16 %v401
        %v1001 = vunpack.c.h.b16 %v401
        %v1002 = vunpack.c.l.b16 %v402
        %v1003 = vunpack.c.h.b16 %v402
        %v1004 = vunpack.c.l.b16 %v403
        %v1005 = vunpack.c.h.b16 %v403
        %v1006 = vunpack.c.l.b16 %v404
        %v1007 = vunpack.c.h.b16 %v404
        %v1008 = vunpack.c.l.b16 %v405
        %v1009 = vunpack.c.h.b16 %v405
        %v1010 = vunpack.c.l.b16 %v406
        %v1011 = vunpack.c.h.b16 %v406
        %v1012 = vunpack.c.l.b16 %v407
        %v1013 = vunpack.c.h.b16 %v407
        %v1014 = vunpack.c.l.b16 %v408
        %v1015 = vunpack.c.h.b16 %v408
        %v1016 = vunpack.c.l.b16 %v409
        %v1017 = vunpack.c.h.b16 %v409
        %v1018 = vunpack.c.l.b16 %v410
        %v1019 = vunpack.c.h.b16 %v410
        %v1020 = vunpack.c.l.b16 %v411
        %v1021 = vunpack.c.h.b16 %v411
        %v1022 = vunpack.c.l.b16 %v412
        %v1023 = vunpack.c.h.b16 %v412
        %v1024 = vunpack.c.l.b16 %v413
        %v1025 = vunpack.c.h.b16 %v413
        %v1026 = vunpack.c.l.b16 %v414
        %v1027 = vunpack.c.h.b16 %v414
        %v1028 = vunpack.c.l.b16 %v415
        %v1029 = vunpack.c.h.b16 %v415
        %v1030 = vunpack.c.l.b16 %v416
        %v1031 = vunpack.c.h.b16 %v416
        %v1032 = vunpack.c.l.b16 %v417
        %v1033 = vunpack.c.h.b16 %v417
        %v1034 = vunpack.c.l.b16 %v418
        %v1035 = vunpack.c.h.b16 %v418
        %v1036 = vunpack.c.l.b16 %v419
        %v1037 = vunpack.c.h.b16 %v419
        %v1038 = vunpack.c.l.b16 %v420
        %v1039 = vunpack.c.h.b16 %v420
        %v1040 = vunpack.c.l.b16 %v421
        %v1041 = vunpack.c.h.b16 %v421
        %v1042 = vunpack.c.l.b16 %v422
        %v1043 = vunpack.c.h.b16 %v422
        %v1044 = vunpack.c.l.b16 %v423
        %v1045 = vunpack.c.h.b16 %v423
        %v1046 = vunpack.c.l.b16 %v424
        %v1047 = vunpack.c.h.b16 %v424
        %v1048 = vunpack.c.l.b16 %v425
        %v1049 = vunpack.c.h.b16 %v425
        %v1050 = vunpack.c.l.b16 %v426
        %v1051 = vunpack.c.h.b16 %v426
        %v1052 = vunpack.c.l.b16 %v427
        %v1053 = vunpack.c.h.b16 %v427
        %v1054 = vunpack.c.l.b16 %v428
        %v1055 = vunpack.c.h.b16 %v428
        %v1056 = vunpack.c.l.b16 %v429
        %v1057 = vunpack.c.h.b16 %v429
        %v1058 = vunpack.c.l.b16 %v430
        %v1059 = vunpack.c.h.b16 %v430
        %v1060 = vunpack.c.l.b16 %v431
        %v1061 = vunpack.c.h.b16 %v431
        %v1062 = vunpack.c.l.b16 %v432
        %v1063 = vunpack.c.h.b16 %v432
        %v1064 = vunpack.c.l.b16 %v433
        %v1065 = vunpack.c.h.b16 %v433
        %v1066 = vunpack.c.l.b16 %v434
        %v1067 = vunpack.c.h.b16 %v434
        %v1068 = vunpack.c.l.b16 %v435
        %v1069 = vunpack.c.h.b16 %v435
        %v1070 = vunpack.c.l.b16 %v436
        %v1071 = vunpack.c.h.b16 %v436
        %v1072 = vunpack.c.l.b16 %v437
        %v1073 = vunpack.c.h.b16 %v437
        %v1074 = vunpack.c.l.b16 %v438
        %v1075 = vunpack.c.h.b16 %v438
        %v1076 = vunpack.c.l.b16 %v439
        %v1077 = vunpack.c.h.b16 %v439
        %v1078 = vunpack.c.l.b16 %v440
        %v1079 = vunpack.c.h.b16 %v440
        %v1080 = vunpack.c.l.b16 %v441
        %v1081 = vunpack.c.h.b16 %v441
        %v1082 = vunpack.c.l.b16 %v442
        %v1083 = vunpack.c.h.b16 %v442
        %v1084 = vunpack.c.l.b16 %v443
        %v1085 = vunpack.c.h.b16 %v443
        %v1086 = vunpack.c.l.b16 %v444
        %v1087 = vunpack.c.h.b16 %v444
        %v1088 = vunpack.c.l.b16 %v445
        %v1089 = vunpack.c.h.b16 %v445
        %v1090 = vunpack.c.l.b16 %v446
        %v1091 = vunpack.c.h.b16 %v446
        %v1092 = vunpack.c.l.b16 %v447
        %v1093 = vunpack.c.h.b16 %v447
        %v1094 = vunpack.c.l.b16 %v448
        %v1095 = vunpack.c.h.b16 %v448
        %v1096 = vunpack.c.l.b16 %v449
        %v1097 = vunpack.c.h.b16 %v449
        %v1098 = vunpack.c.l.b16 %v450
        %v1099 = vunpack.c.h.b16 %v450
        %v1100 = vunpack.c.l.b16 %v451
        %v1101 = vunpack.c.h.b16 %v451
        %v1102 = vunpack.c.l.b16 %v452
        %v1103 = vunpack.c.h.b16 %v452
        %v1104 = vunpack.c.l.b16 %v453
        %v1105 = vunpack.c.h.b16 %v453
        %v1106 = vunpack.c.l.b16 %v454
        %v1107 = vunpack.c.h.b16 %v454
        %v1108 = vunpack.c.l.b16 %v455
        %v1109 = vunpack.c.h.b16 %v455
        %v1110 = vunpack.c.l.b16 %v456
        %v1111 = vunpack.c.h.b16 %v456
        %v1112 = vunpack.c.l.b16 %v457
        %v1113 = vunpack.c.h.b16 %v457
        %v1114 = vunpack.c.l.b16 %v458
        %v1115 = vunpack.c.h.b16 %v458
        %v1116 = vunpack.c.l.b16 %v459
        %v1117 = vunpack.c.h.b16 %v459
        %v1118 = vunpack.c.l.b16 %v460
        %v1119 = vunpack.c.h.b16 %v460
        %v1120 = vunpack.c.l.b16 %v461
        %v1121 = vunpack.c.h.b16 %v461
        %v1122 = vunpack.c.l.b16 %v462
        %v1123 = vunpack.c.h.b16 %v462
        %v1124 = vunpack.c.l.b16 %v463
        %v1125 = vunpack.c.h.b16 %v463
        %v1126 = vunpack.c.l.b16 %v464
        %v1127 = vunpack.c.h.b16 %v464
        %v1128 = vunpack.c.l.b16 %v465
        %v1129 = vunpack.c.h.b16 %v465
        %v1130 = vunpack.c.l.b16 %v466
        %v1131 = vunpack.c.h.b16 %v466
        %v1132 = vunpack.c.l.b16 %v467
        %v1133 = vunpack.c.h.b16 %v467
        %v1134 = vunpack.c.l.b16 %v468
        %v1135 = vunpack.c.h.b16 %v468
        %v1136 = vunpack.c.l.b16 %v469
        %v1137 = vunpack.c.h.b16 %v469
        %v1138 = vunpack.c.l.b16 %v470
        %v1139 = vunpack.c.h.b16 %v470
        %v1140 = vunpack.c.l.b16 %v471
        %v1141 = vunpack.c.h.b16 %v471
        %v1142 = vunpack.c.l.b16 %v472
        %v1143 = vunpack.c.h.b16 %v472
        %v1144 = vunpack.c.l.b16 %v473
        %v1145 = vunpack.c.h.b16 %v473
        %v1146 = vunpack.c.l.b16 %v474
        %v1147 = vunpack.c.h.b16 %v474
        %v1148 = vunpack.c.l.b16 %v475
        %v1149 = vunpack.c.h.b16 %v475
        %v1150 = vunpack.c.l.b16 %v476
        %v1151 = vunpack.c.h.b16 %v476
        %v1152 = vunpack.c.l.b16 %v477
        %v1153 = vunpack.c.h.b16 %v477
        %v1154 = vunpack.c.l.b16 %v478
        %v1155 = vunpack.c.h.b16 %v478
        %v1156 = vunpack.c.l.b16 %v479
        %v1157 = vunpack.c.h.b16 %v479
        %v1158 = vunpack.c.l.b16 %v480
        %v1159 = vunpack.c.h.b16 %v480
        %v1160 = vunpack.c.l.b16 %v481
        %v1161 = vunpack.c.h.b16 %v481
        %v1162 = vunpack.c.l.b16 %v482
        %v1163 = vunpack.c.h.b16 %v482
        %v1164 = vunpack.c.l.b16 %v483
        %v1165 = vunpack.c.h.b16 %v483
        %v1166 = vunpack.c.l.b16 %v484
        %v1167 = vunpack.c.h.b16 %v484
        %v1168 = vunpack.c.l.b16 %v485
        %v1169 = vunpack.c.h.b16 %v485
        %v1170 = vunpack.c.l.b16 %v486
        %v1171 = vunpack.c.h.b16 %v486
        %v1172 = vunpack.c.l.b16 %v487
        %v1173 = vunpack.c.h.b16 %v487
        %v1174 = vunpack.c.l.b16 %v488
        %v1175 = vunpack.c.h.b16 %v488
        %v1176 = vunpack.c.l.b16 %v489
        %v1177 = vunpack.c.h.b16 %v489
        %v1178 = vunpack.c.l.b16 %v490
        %v1179 = vunpack.c.h.b16 %v490
        %v1180 = vunpack.c.l.b16 %v491
        %v1181 = vunpack.c.h.b16 %v491
        %v1182 = vunpack.c.l.b16 %v492
        %v1183 = vunpack.c.h.b16 %v492
        %v1184 = vunpack.c.l.b16 %v493
        %v1185 = vunpack.c.h.b16 %v493
        %v1186 = vunpack.c.l.b16 %v494
        %v1187 = vunpack.c.h.b16 %v494
        %v1188 = vunpack.c.l.b16 %v495
        %v1189 = vunpack.c.h.b16 %v495
        %v1190 = vunpack.c.l.b16 %v496
        %v1191 = vunpack.c.h.b16 %v496
        %v1192 = vunpack.c.l.b16 %v497
        %v1193 = vunpack.c.h.b16 %v497
        %v1194 = vunpack.c.l.b16 %v498
        %v1195 = vunpack.c.h.b16 %v498
        %v1196 = vunpack.c.l.b16 %v499
        %v1197 = vunpack.c.h.b16 %v499
        %v1198 = vunpack.c.l.b16 %v500
        %v1199 = vunpack.c.h.b16 %v500
        %v1200 = vunpack.c.l.b16 %v501
        %v1201 = vunpack.c.h.b16 %v501
        %v1202 = vunpack.c.l.b16 %v502
        %v1203 = vunpack.c.h.b16 %v502
        %v1204 = vunpack.c.l.b16 %v503
        %v1205 = vunpack.c.h.b16 %v503
        %v1206 = vunpack.c.l.b16 %v504
        %v1207 = vunpack.c.h.b16 %v504
        %v1208 = vunpack.c.l.b16 %v505
        %v1209 = vunpack.c.h.b16 %v505
        %v1210 = vunpack.c.l.b16 %v506
        %v1211 = vunpack.c.h.b16 %v506
        %v1212 = vunpack.c.l.b16 %v507
        %v1213 = vunpack.c.h.b16 %v507
        %v1214 = vunpack.c.l.b16 %v508
        %v1215 = vunpack.c.h.b16 %v508
        %v1216 = vunpack.c.l.b16 %v509
        %v1217 = vunpack.c.h.b16 %v509
        %v1218 = vunpack.c.l.b16 %v510
        %v1219 = vunpack.c.h.b16 %v510
        %v1220 = vunpack.c.l.b16 %v511
        %v1221 = vunpack.c.h.b16 %v511
        %v1222 = vunpack.c.l.b16 %v512
        %v1223 = vunpack.c.h.b16 %v512
        %v1224 = vunpack.c.l.b16 %v513
        %v1225 = vunpack.c.h.b16 %v513
        %v1226 = vunpack.c.l.b16 %v514
        %v1227 = vunpack.c.h.b16 %v514
        %v1228 = vunpack.c.l.b16 %v515
        %v1229 = vunpack.c.h.b16 %v515
        %v1230 = vunpack.c.l.b16 %v516
        %v1231 = vunpack.c.h.b16 %v516
        %v1232 = vunpack.c.l.b16 %v517
        %v1233 = vunpack.c.h.b16 %v517
        %v1234 = vunpack.c.l.b16 %v518
        %v1235 = vunpack.c.h.b16 %v518
        %v1236 = vunpack.c.l.b16 %v519
        %v1237 = vunpack.c.h.b16 %v519
        %v1238 = vunpack.c.l.b16 %v520
        %v1239 = vunpack.c.h.b16 %v520
        %v1240 = vunpack.c.l.b16 %v521
        %v1241 = vunpack.c.h.b16 %v521
        %v1242 = vunpack.c.l.b16 %v522
        %v1243 = vunpack.c.h.b16 %v522
        %v1244 = vunpack.c.l.b16 %v523
        %v1245 = vunpack.c.h.b16 %v523
        %v1246 = vunpack.c.l.b16 %v524
        %v1247 = vunpack.c.h.b16 %v524
        %v1248 = vunpack.c.l.b16 %v525
        %v1249 = vunpack.c.h.b16 %v525
        %v1250 = vunpack.c.l.b16 %v526
        %v1251 = vunpack.c.h.b16 %v526
        %v1252 = vunpack.c.l.b16 %v527
        %v1253 = vunpack.c.h.b16 %v527
        %v1254 = vunpack.c.l.b16 %v528
        %v1255 = vunpack.c.h.b16 %v528
        %v1256 = vunpack.c.l.b16 %v529
        %v1257 = vunpack.c.h.b16 %v529
        %v1258 = vunpack.c.l.b16 %v530
        %v1259 = vunpack.c.h.b16 %v530
        %v1260 = vunpack.c.l.b16 %v531
        %v1261 = vunpack.c.h.b16 %v531
        %v1262 = vunpack.c.l.b16 %v532
        %v1263 = vunpack.c.h.b16 %v532
        %v1264 = vunpack.c.l.b16 %v533
        %v1265 = vunpack.c.h.b16 %v533
        %v1266 = vunpack.c.l.b16 %v534
        %v1267 = vunpack.c.h.b16 %v534
        %v1268 = vunpack.c.l.b16 %v535
        %v1269 = vunpack.c.h.b16 %v535
        %v1270 = vunpack.c.l.b16 %v536
        %v1271 = vunpack.c.h.b16 %v536
        %v1272 = vunpack.c.l.b16 %v537
        %v1273 = vunpack.c.h.b16 %v537
        %v1274 = vunpack.c.l.b16 %v538
        %v1275 = vunpack.c.h.b16 %v538
        %v1276 = vunpack.c.l.b16 %v539
        %v1277 = vunpack.c.h.b16 %v539
        %v1278 = vunpack.c.l.b16 %v540
        %v1279 = vunpack.c.h.b16 %v540
        %v1280 = vunpack.c.l.b16 %v541
        %v1281 = vunpack.c.h.b16 %v541
        %v1282 = vunpack.c.l.b16 %v542
        %v1283 = vunpack.c.h.b16 %v542
        %v1284 = vunpack.c.l.b16 %v543
        %v1285 = vunpack.c.h.b16 %v543
        %v1286 = vunpack.c.l.b16 %v544
        %v1287 = vunpack.c.h.b16 %v544
        %v1288 = vunpack.c.l.b16 %v545
        %v1289 = vunpack.c.h.b16 %v545
        %v1290 = vunpack.c.l.b16 %v546
        %v1291 = vunpack.c.h.b16 %v546
        %v1292 = vunpack.c.l.b16 %v547
        %v1293 = vunpack.c.h.b16 %v547
        %v1294 = vunpack.c.l.b16 %v548
        %v1295 = vunpack.c.h.b16 %v548
        %v1296 = vunpack.c.l.b16 %v549
        %v1297 = vunpack.c.h.b16 %v549
        %v1298 = vunpack.c.l.b16 %v550
        %v1299 = vunpack.c.h.b16 %v550
        %v1300 = vunpack.c.l.b16 %v551
        %v1301 = vunpack.c.h.b16 %v551
        %v1302 = vunpack.c.l.b16 %v552
        %v1303 = vunpack.c.h.b16 %v552
        %v1304 = vunpack.c.l.b16 %v553
        %v1305 = vunpack.c.h.b16 %v553
        %v1306 = vunpack.c.l.b16 %v554
        %v1307 = vunpack.c.h.b16 %v554
        %v1308 = vunpack.c.l.b16 %v555
        %v1309 = vunpack.c.h.b16 %v555
        %v1310 = vunpack.c.l.b16 %v556
        %v1311 = vunpack.c.h.b16 %v556
        %v1312 = vunpack.c.l.b16 %v557
        %v1313 = vunpack.c.h.b16 %v557
        %v1314 = vunpack.c.l.b16 %v558
        %v1315 = vunpack.c.h.b16 %v558
        %v1316 = vunpack.c.l.b16 %v559
        %v1317 = vunpack.c.h.b16 %v559
        %v1318 = vunpack.c.l.b16 %v560
        %v1319 = vunpack.c.h.b16 %v560
        %v1320 = vunpack.c.l.b16 %v561
        %v1321 = vunpack.c.h.b16 %v561
        %v1322 = vunpack.c.l.b16 %v562
        %v1323 = vunpack.c.h.b16 %v562
        %v1324 = vunpack.c.l.b16 %v563
        %v1325 = vunpack.c.h.b16 %v563
        %v1326 = vunpack.c.l.b16 %v564
        %v1327 = vunpack.c.h.b16 %v564
        %v1328 = vunpack.c.l.b16 %v565
        %v1329 = vunpack.c.h.b16 %v565
        %v1330 = vunpack.c.l.b16 %v566
        %v1331 = vunpack.c.h.b16 %v566
        %v1332 = vunpack.c.l.b16 %v567
        %v1333 = vunpack.c.h.b16 %v567
        %v1334 = vunpack.c.l.b16 %v568
        %v1335 = vunpack.c.h.b16 %v568
        %v1336 = vunpack.c.l.b16 %v569
        %v1337 = vunpack.c.h.b16 %v569
        %v1338 = vunpack.c.l.b16 %v570
        %v1339 = vunpack.c.h.b16 %v570
        %v1340 = vunpack.c.l.b16 %v571
        %v1341 = vunpack.c.h.b16 %v571
        %v1342 = vunpack.c.l.b16 %v572
        %v1343 = vunpack.c.h.b16 %v572
        %v1344 = vunpack.c.l.b16 %v573
        %v1345 = vunpack.c.h.b16 %v573
        %v1346 = vunpack.c.l.b16 %v574
        %v1347 = vunpack.c.h.b16 %v574
        %v1348 = vunpack.c.l.b16 %v575
        %v1349 = vunpack.c.h.b16 %v575
        %v1350 = vunpack.c.l.b16 %v576
        %v1351 = vunpack.c.h.b16 %v576
        %v1352 = vunpack.c.l.b16 %v577
        %v1353 = vunpack.c.h.b16 %v577
        %v1354 = vunpack.c.l.b16 %v578
        %v1355 = vunpack.c.h.b16 %v578
        %v1356 = vunpack.c.l.b16 %v579
        %v1357 = vunpack.c.h.b16 %v579
        %v1358 = vunpack.c.l.b16 %v580
        %v1359 = vunpack.c.h.b16 %v580
        %v1360 = vunpack.c.l.b16 %v581
        %v1361 = vunpack.c.h.b16 %v581
        %v1362 = vunpack.c.l.b16 %v582
        %v1363 = vunpack.c.h.b16 %v582
        %v1364 = vunpack.c.l.b16 %v583
        %v1365 = vunpack.c.h.b16 %v583
        %v1366 = vunpack.c.l.b16 %v584
        %v1367 = vunpack.c.h.b16 %v584
        %v1368 = vunpack.c.l.b16 %v585
        %v1369 = vunpack.c.h.b16 %v585
        %v1370 = vunpack.c.l.b16 %v586
        %v1371 = vunpack.c.h.b16 %v586
        %v1372 = vunpack.c.l.b16 %v587
        %v1373 = vunpack.c.h.b16 %v587
        %v1374 = vunpack.c.l.b16 %v588
        %v1375 = vunpack.c.h.b16 %v588
        %v1376 = vunpack.c.l.b16 %v589
        %v1377 = vunpack.c.h.b16 %v589
        %v1378 = vunpack.c.l.b16 %v590
        %v1379 = vunpack.c.h.b16 %v590
        %v1380 = vunpack.c.l.b16 %v591
        %v1381 = vunpack.c.h.b16 %v591
        %v1382 = vpack.c.b16 %v874, %v870
        %v1383 = vpack.c.b16 %v875, %v871
        %v1384 = vpack.c.b16 %v876, %v872
        %v1385 = vpack.c.b16 %v877, %v873
        %v1386 = vpack.c.b16 %v882, %v878
        %v1387 = vpack.c.b16 %v883, %v879
        %v1388 = vpack.c.b16 %v884, %v880
        %v1389 = vpack.c.b16 %v885, %v881
        %v1390 = vpack.c.b16 %v890, %v886
        %v1391 = vpack.c.b16 %v891, %v887
        %v1392 = vpack.c.b16 %v892, %v888
        %v1393 = vpack.c.b16 %v893, %v889
        %v1394 = vpack.c.b16 %v898, %v894
        %v1395 = vpack.c.b16 %v899, %v895
        %v1396 = vpack.c.b16 %v900, %v896
        %v1397 = vpack.c.b16 %v901, %v897
        %v1398 = vpack.c.b16 %v906, %v902
        %v1399 = vpack.c.b16 %v907, %v903
        %v1400 = vpack.c.b16 %v908, %v904
        %v1401 = vpack.c.b16 %v909, %v905
        %v1402 = vpack.c.b16 %v914, %v910
        %v1403 = vpack.c.b16 %v915, %v911
        %v1404 = vpack.c.b16 %v916, %v912
        %v1405 = vpack.c.b16 %v917, %v913
        %v1406 = vpack.c.b16 %v922, %v918
        %v1407 = vpack.c.b16 %v923, %v919
        %v1408 = vpack.c.b16 %v924, %v920
        %v1409 = vpack.c.b16 %v925, %v921
        %v1410 = vpack.c.b16 %v930, %v926
        %v1411 = vpack.c.b16 %v931, %v927
        %v1412 = vpack.c.b16 %v932, %v928
        %v1413 = vpack.c.b16 %v933, %v929
        %v1414 = vpack.c.b16 %v938, %v934
        %v1415 = vpack.c.b16 %v939, %v935
        %v1416 = vpack.c.b16 %v940, %v936
        %v1417 = vpack.c.b16 %v941, %v937
        %v1418 = vpack.c.b16 %v946, %v942
        %v1419 = vpack.c.b16 %v947, %v943
        %v1420 = vpack.c.b16 %v948, %v944
        %v1421 = vpack.c.b16 %v949, %v945
        %v1422 = vpack.c.b16 %v954, %v950
        %v1423 = vpack.c.b16 %v955, %v951
        %v1424 = vpack.c.b16 %v956, %v952
        %v1425 = vpack.c.b16 %v957, %v953
        %v1426 = vpack.c.b16 %v962, %v958
        %v1427 = vpack.c.b16 %v963, %v959
        %v1428 = vpack.c.b16 %v964, %v960
        %v1429 = vpack.c.b16 %v965, %v961
        %v1430 = vpack.c.b16 %v970, %v966
        %v1431 = vpack.c.b16 %v971, %v967
        %v1432 = vpack.c.b16 %v972, %v968
        %v1433 = vpack.c.b16 %v973, %v969
        %v1434 = vpack.c.b16 %v978, %v974
        %v1435 = vpack.c.b16 %v979, %v975
        %v1436 = vpack.c.b16 %v980, %v976
        %v1437 = vpack.c.b16 %v981, %v977
        %v1438 = vpack.c.b16 %v986, %v982
        %v1439 = vpack.c.b16 %v987, %v983
        %v1440 = vpack.c.b16 %v988, %v984
        %v1441 = vpack.c.b16 %v989, %v985
        %v1442 = vpack.c.b16 %v994, %v990
        %v1443 = vpack.c.b16 %v995, %v991
        %v1444 = vpack.c.b16 %v996, %v992
        %v1445 = vpack.c.b16 %v997, %v993
        %v1446 = vpack.c.b16 %v1002, %v998
        %v1447 = vpack.c.b16 %v1003, %v999
        %v1448 = vpack.c.b16 %v1004, %v1000
        %v1449 = vpack.c.b16 %v1005, %v1001
        %v1450 = vpack.c.b16 %v1010, %v1006
        %v1451 = vpack.c.b16 %v1011, %v1007
        %v1452 = vpack.c.b16 %v1012, %v1008
        %v1453 = vpack.c.b16 %v1013, %v1009
        %v1454 = vpack.c.b16 %v1018, %v1014
        %v1455 = vpack.c.b16 %v1019, %v1015
        %v1456 = vpack.c.b16 %v1020, %v1016
        %v1457 = vpack.c.b16 %v1021, %v1017
        %v1458 = vpack.c.b16 %v1026, %v1022
        %v1459 = vpack.c.b16 %v1027, %v1023
        %v1460 = vpack.c.b16 %v1028, %v1024
        %v1461 = vpack.c.b16 %v1029, %v1025
        %v1462 = vpack.c.b16 %v1034, %v1030
        %v1463 = vpack.c.b16 %v1035, %v1031
        %v1464 = vpack.c.b16 %v1036, %v1032
        %v1465 = vpack.c.b16 %v1037, %v1033
        %v1466 = vpack.c.b16 %v1042, %v1038
        %v1467 = vpack.c.b16 %v1043, %v1039
        %v1468 = vpack.c.b16 %v1044, %v1040
        %v1469 = vpack.c.b16 %v1045, %v1041
        %v1470 = vpack.c.b16 %v1050, %v1046
        %v1471 = vpack.c.b16 %v1051, %v1047
        %v1472 = vpack.c.b16 %v1052, %v1048
        %v1473 = vpack.c.b16 %v1053, %v1049
        %v1474 = vpack.c.b16 %v1058, %v1054
        %v1475 = vpack.c.b16 %v1059, %v1055
        %v1476 = vpack.c.b16 %v1060, %v1056
        %v1477 = vpack.c.b16 %v1061, %v1057
        %v1478 = vpack.c.b16 %v1066, %v1062
        %v1479 = vpack.c.b16 %v1067, %v1063
        %v1480 = vpack.c.b16 %v1068, %v1064
        %v1481 = vpack.c.b16 %v1069, %v1065
        %v1482 = vpack.c.b16 %v1074, %v1070
        %v1483 = vpack.c.b16 %v1075, %v1071
        %v1484 = vpack.c.b16 %v1076, %v1072
        %v1485 = vpack.c.b16 %v1077, %v1073
        %v1486 = vpack.c.b16 %v1082, %v1078
        %v1487 = vpack.c.b16 %v1083, %v1079
        %v1488 = vpack.c.b16 %v1084, %v1080
        %v1489 = vpack.c.b16 %v1085, %v1081
        %v1490 = vpack.c.b16 %v1090, %v1086
        %v1491 = vpack.c.b16 %v1091, %v1087
        %v1492 = vpack.c.b16 %v1092, %v1088
        %v1493 = vpack.c.b16 %v1093, %v1089
        %v1494 = vpack.c.b16 %v1098, %v1094
        %v1495 = vpack.c.b16 %v1099, %v1095
        %v1496 = vpack.c.b16 %v1100, %v1096
        %v1497 = vpack.c.b16 %v1101, %v1097
        %v1498 = vpack.c.b16 %v1106, %v1102
        %v1499 = vpack.c.b16 %v1107, %v1103
        %v1500 = vpack.c.b16 %v1108, %v1104
        %v1501 = vpack.c.b16 %v1109, %v1105
        %v1502 = vpack.c.b16 %v1114, %v1110
        %v1503 = vpack.c.b16 %v1115, %v1111
        %v1504 = vpack.c.b16 %v1116, %v1112
        %v1505 = vpack.c.b16 %v1117, %v1113
        %v1506 = vpack.c.b16 %v1122, %v1118
        %v1507 = vpack.c.b16 %v1123, %v1119
        %v1508 = vpack.c.b16 %v1124, %v1120
        %v1509 = vpack.c.b16 %v1125, %v1121
        %v1510 = vpack.c.b16 %v1130, %v1126
        %v1511 = vpack.c.b16 %v1131, %v1127
        %v1512 = vpack.c.b16 %v1132, %v1128
        %v1513 = vpack.c.b16 %v1133, %v1129
        %v1514 = vpack.c.b16 %v1138, %v1134
        %v1515 = vpack.c.b16 %v1139, %v1135
        %v1516 = vpack.c.b16 %v1140, %v1136
        %v1517 = vpack.c.b16 %v1141, %v1137
        %v1518 = vpack.c.b16 %v1146, %v1142
        %v1519 = vpack.c.b16 %v1147, %v1143
        %v1520 = vpack.c.b16 %v1148, %v1144
        %v1521 = vpack.c.b16 %v1149, %v1145
        %v1522 = vpack.c.b16 %v1154, %v1150
        %v1523 = vpack.c.b16 %v1155, %v1151
        %v1524 = vpack.c.b16 %v1156, %v1152
        %v1525 = vpack.c.b16 %v1157, %v1153
        %v1526 = vpack.c.b16 %v1162, %v1158
        %v1527 = vpack.c.b16 %v1163, %v1159
        %v1528 = vpack.c.b16 %v1164, %v1160
        %v1529 = vpack.c.b16 %v1165, %v1161
        %v1530 = vpack.c.b16 %v1170, %v1166
        %v1531 = vpack.c.b16 %v1171, %v1167
        %v1532 = vpack.c.b16 %v1172, %v1168
        %v1533 = vpack.c.b16 %v1173, %v1169
        %v1534 = vpack.c.b16 %v1178, %v1174
        %v1535 = vpack.c.b16 %v1179, %v1175
        %v1536 = vpack.c.b16 %v1180, %v1176
        %v1537 = vpack.c.b16 %v1181, %v1177
        %v1538 = vpack.c.b16 %v1186, %v1182
        %v1539 = vpack.c.b16 %v1187, %v1183
        %v1540 = vpack.c.b16 %v1188, %v1184
        %v1541 = vpack.c.b16 %v1189, %v1185
        %v1542 = vpack.c.b16 %v1194, %v1190
        %v1543 = vpack.c.b16 %v1195, %v1191
        %v1544 = vpack.c.b16 %v1196, %v1192
        %v1545 = vpack.c.b16 %v1197, %v1193
        %v1546 = vpack.c.b16 %v1202, %v1198
        %v1547 = vpack.c.b16 %v1203, %v1199
        %v1548 = vpack.c.b16 %v1204, %v1200
        %v1549 = vpack.c.b16 %v1205, %v1201
        %v1550 = vpack.c.b16 %v1210, %v1206
        %v1551 = vpack.c.b16 %v1211, %v1207
        %v1552 = vpack.c.b16 %v1212, %v1208
        %v1553 = vpack.c.b16 %v1213, %v1209
        %v1554 = vpack.c.b16 %v1218, %v1214
        %v1555 = vpack.c.b16 %v1219, %v1215
        %v1556 = vpack.c.b16 %v1220, %v1216
        %v1557 = vpack.c.b16 %v1221, %v1217
        %v1558 = vpack.c.b16 %v1226, %v1222
        %v1559 = vpack.c.b16 %v1227, %v1223
        %v1560 = vpack.c.b16 %v1228, %v1224
        %v1561 = vpack.c.b16 %v1229, %v1225
        %v1562 = vpack.c.b16 %v1234, %v1230
        %v1563 = vpack.c.b16 %v1235, %v1231
        %v1564 = vpack.c.b16 %v1236, %v1232
        %v1565 = vpack.c.b16 %v1237, %v1233
        %v1566 = vpack.c.b16 %v1242, %v1238
        %v1567 = vpack.c.b16 %v1243, %v1239
        %v1568 = vpack.c.b16 %v1244, %v1240
        %v1569 = vpack.c.b16 %v1245, %v1241
        %v1570 = vpack.c.b16 %v1250, %v1246
        %v1571 = vpack.c.b16 %v1251, %v1247
        %v1572 = vpack.c.b16 %v1252, %v1248
        %v1573 = vpack.c.b16 %v1253, %v1249
        %v1574 = vpack.c.b16 %v1258, %v1254
        %v1575 = vpack.c.b16 %v1259, %v1255
        %v1576 = vpack.c.b16 %v1260, %v1256
        %v1577 = vpack.c.b16 %v1261, %v1257
        %v1578 = vpack.c.b16 %v1266, %v1262
        %v1579 = vpack.c.b16 %v1267, %v1263
        %v1580 = vpack.c.b16 %v1268, %v1264
        %v1581 = vpack.c.b16 %v1269, %v1265
        %v1582 = vpack.c.b16 %v1274, %v1270
        %v1583 = vpack.c.b16 %v1275, %v1271
        %v1584 = vpack.c.b16 %v1276, %v1272
        %v1585 = vpack.c.b16 %v1277, %v1273
        %v1586 = vpack.c.b16 %v1282, %v1278
        %v1587 = vpack.c.b16 %v1283, %v1279
        %v1588 = vpack.c.b16 %v1284, %v1280
        %v1589 = vpack.c.b16 %v1285, %v1281
        %v1590 = vpack.c.b16 %v1290, %v1286
        %v1591 = vpack.c.b16 %v1291, %v1287
        %v1592 = vpack.c.b16 %v1292, %v1288
        %v1593 = vpack.c.b16 %v1293, %v1289
        %v1594 = vpack.c.b16 %v1298, %v1294
        %v1595 = vpack.c.b16 %v1299, %v1295
        %v1596 = vpack.c.b16 %v1300, %v1296
        %v1597 = vpack.c.b16 %v1301, %v1297
        %v1598 = vpack.c.b16 %v1306, %v1302
        %v1599 = vpack.c.b16 %v1307, %v1303
        %v1600 = vpack.c.b16 %v1308, %v1304
        %v1601 = vpack.c.b16 %v1309, %v1305
        %v1602 = vpack.c.b16 %v1314, %v1310
        %v1603 = vpack.c.b16 %v1315, %v1311
        %v1604 = vpack.c.b16 %v1316, %v1312
        %v1605 = vpack.c.b16 %v1317, %v1313
        %v1606 = vpack.c.b16 %v1322, %v1318
        %v1607 = vpack.c.b16 %v1323, %v1319
        %v1608 = vpack.c.b16 %v1324, %v1320
        %v1609 = vpack.c.b16 %v1325, %v1321
        %v1610 = vpack.c.b16 %v1330, %v1326
        %v1611 = vpack.c.b16 %v1331, %v1327
        %v1612 = vpack.c.b16 %v1332, %v1328
        %v1613 = vpack.c.b16 %v1333, %v1329
        %v1614 = vpack.c.b16 %v1338, %v1334
        %v1615 = vpack.c.b16 %v1339, %v1335
        %v1616 = vpack.c.b16 %v1340, %v1336
        %v1617 = vpack.c.b16 %v1341, %v1337
        %v1618 = vpack.c.b16 %v1346, %v1342
        %v1619 = vpack.c.b16 %v1347, %v1343
        %v1620 = vpack.c.b16 %v1348, %v1344
        %v1621 = vpack.c.b16 %v1349, %v1345
        %v1622 = vpack.c.b16 %v1354, %v1350
        %v1623 = vpack.c.b16 %v1355, %v1351
        %v1624 = vpack.c.b16 %v1356, %v1352
        %v1625 = vpack.c.b16 %v1357, %v1353
        %v1626 = vpack.c.b16 %v1362, %v1358
        %v1627 = vpack.c.b16 %v1363, %v1359
        %v1628 = vpack.c.b16 %v1364, %v1360
        %v1629 = vpack.c.b16 %v1365, %v1361
        %v1630 = vpack.c.b16 %v1370, %v1366
        %v1631 = vpack.c.b16 %v1371, %v1367
        %v1632 = vpack.c.b16 %v1372, %v1368
        %v1633 = vpack.c.b16 %v1373, %v1369
        %v1634 = vpack.c.b16 %v1378, %v1374
        %v1635 = vpack.c.b16 %v1379, %v1375
        %v1636 = vpack.c.b16 %v1380, %v1376
        %v1637 = vpack.c.b16 %v1381, %v1377
        %1894 = vmatprep.subr.bf16.mxu0 %v1383
        %1895 = vmatpush1.bf16.msra.mxu0 %v1382
        %1896 = vmatprep.subr.bf16.mxu0 %v1387
        %1897 = vmatpush1.bf16.msra.mxu0 %v1386
        %1898 = vmatprep.subr.bf16.mxu0 %v1391
        %1899 = vmatpush1.bf16.msra.mxu0 %v1390
        %1900 = vmatprep.subr.bf16.mxu0 %v1395
        %1901 = vmatpush1.bf16.msra.mxu0 %v1394
        %1902 = vmatprep.subr.bf16.mxu0 %v1399
        %1903 = vmatpush1.bf16.msra.mxu0 %v1398
        %1904 = vmatprep.subr.bf16.mxu0 %v1403
        %1905 = vmatpush1.bf16.msra.mxu0 %v1402
        %1906 = vmatprep.subr.bf16.mxu0 %v1407
        %1907 = vmatpush1.bf16.msra.mxu0 %v1406
        %1908 = vmatprep.subr.bf16.mxu0 %v1411
        %1909 = vmatpush1.bf16.msra.mxu0 %v1410
        %1910 = vmatprep.subr.bf16.mxu0 %v1415
        %1911 = vmatpush1.bf16.msra.mxu0 %v1414
        %1912 = vmatprep.subr.bf16.mxu0 %v1419
        %1913 = vmatpush1.bf16.msra.mxu0 %v1418
        %1914 = vmatprep.subr.bf16.mxu0 %v1423
        %1915 = vmatpush1.bf16.msra.mxu0 %v1422
        %1916 = vmatprep.subr.bf16.mxu0 %v1427
        %1917 = vmatpush1.bf16.msra.mxu0 %v1426
        %1918 = vmatprep.subr.bf16.mxu0 %v1431
        %1919 = vmatpush1.bf16.msra.mxu0 %v1430
        %1920 = vmatprep.subr.bf16.mxu0 %v1435
        %1921 = vmatpush1.bf16.msra.mxu0 %v1434
        %1922 = vmatprep.subr.bf16.mxu0 %v1439
        %1923 = vmatpush1.bf16.msra.mxu0 %v1438
        %1924 = vmatprep.subr.bf16.mxu0 %v1443
        %1925 = vmatpush1.bf16.msra.mxu0 %v1442
        %1926 = vmatprep.mubr.bf16.mxu0 %v321
        %1927 = vmatmul.mubr.bf16.gmra.mrb[0].mxu0 %v320
        %v1928 = vpop.f32.mrb[0].mxu0
        %v1929 = vadd.f32 %v597, %v1928
        %v1930 = vpop.f32.mrb[0].mxu0
        %v1931 = vadd.f32 %v601, %v1930
        %v1932 = vpop.f32.mrb[0].mxu0
        %v1933 = vadd.f32 %v597, %v1932
        %v1934 = vpop.f32.mrb[0].mxu0
        %v1935 = vadd.f32 %v601, %v1934
        %1936 = vmatprep.mubr.bf16.mxu0 %v329
        %1937 = vmatmul.mubr.bf16.gmra.mrb[0].mxu0 %v328
        %v1938 = vpop.f32.mrb[0].mxu0
        %v1939 = vadd.f32 %v597, %v1938
        %v1940 = vpop.f32.mrb[0].mxu0
        %v1941 = vadd.f32 %v601, %v1940
        %v1942 = vpop.f32.mrb[0].mxu0
        %v1943 = vadd.f32 %v597, %v1942
        %v1944 = vpop.f32.mrb[0].mxu0
        %v1945 = vadd.f32 %v601, %v1944
        %1946 = vdwg.mxu0
        %1947 = vmatprep.subr.bf16.mxu0 %v1447
        %1948 = vmatpush1.bf16.msra.mxu0 %v1446
        %1949 = vmatprep.subr.bf16.mxu0 %v1451
        %1950 = vmatpush1.bf16.msra.mxu0 %v1450
        %1951 = vmatprep.subr.bf16.mxu0 %v1455
        %1952 = vmatpush1.bf16.msra.mxu0 %v1454
        %1953 = vmatprep.subr.bf16.mxu0 %v1459
        %1954 = vmatpush1.bf16.msra.mxu0 %v1458
        %1955 = vmatprep.subr.bf16.mxu0 %v1463
        %1956 = vmatpush1.bf16.msra.mxu0 %v1462
        %1957 = vmatprep.subr.bf16.mxu0 %v1467
        %1958 = vmatpush1.bf16.msra.mxu0 %v1466
        %1959 = vmatprep.subr.bf16.mxu0 %v1471
        %1960 = vmatpush1.bf16.msra.mxu0 %v1470
        %1961 = vmatprep.subr.bf16.mxu0 %v1475
        %1962 = vmatpush1.bf16.msra.mxu0 %v1474
        %1963 = vmatprep.subr.bf16.mxu0 %v1479
        %1964 = vmatpush1.bf16.msra.mxu0 %v1478
        %1965 = vmatprep.subr.bf16.mxu0 %v1483
        %1966 = vmatpush1.bf16.msra.mxu0 %v1482
        %1967 = vmatprep.subr.bf16.mxu0 %v1487
        %1968 = vmatpush1.bf16.msra.mxu0 %v1486
        %1969 = vmatprep.subr.bf16.mxu0 %v1491
        %1970 = vmatpush1.bf16.msra.mxu0 %v1490
        %1971 = vmatprep.subr.bf16.mxu0 %v1495
        %1972 = vmatpush1.bf16.msra.mxu0 %v1494
        %1973 = vmatprep.subr.bf16.mxu0 %v1499
        %1974 = vmatpush1.bf16.msra.mxu0 %v1498
        %1975 = vmatprep.subr.bf16.mxu0 %v1503
        %1976 = vmatpush1.bf16.msra.mxu0 %v1502
        %1977 = vmatprep.subr.bf16.mxu0 %v1507
        %1978 = vmatpush1.bf16.msra.mxu0 %v1506
        %1979 = vmatprep.mubr.bf16.mxu0 %v323
        %1980 = vmatmul.mubr.bf16.gmra.mrb[0].mxu0 %v322
        %v1981 = vpop.f32.mrb[0].mxu0
        %v1982 = vadd.f32 %v1929, %v1981
        %v1983 = vpop.f32.mrb[0].mxu0
        %v1984 = vadd.f32 %v1931, %v1983
        %v1985 = vpop.f32.mrb[0].mxu0
        %v1986 = vadd.f32 %v1933, %v1985
        %v1987 = vpop.f32.mrb[0].mxu0
        %v1988 = vadd.f32 %v1935, %v1987
        %1989 = vmatprep.mubr.bf16.mxu0 %v331
        %1990 = vmatmul.mubr.bf16.gmra.mrb[0].mxu0 %v330
        %v1991 = vpop.f32.mrb[0].mxu0
        %v1992 = vadd.f32 %v1939, %v1991
        %v1993 = vpop.f32.mrb[0].mxu0
        %v1994 = vadd.f32 %v1941, %v1993
        %v1995 = vpop.f32.mrb[0].mxu0
        %v1996 = vadd.f32 %v1943, %v1995
        %v1997 = vpop.f32.mrb[0].mxu0
        %v1998 = vadd.f32 %v1945, %v1997
        %1999 = vdwg.mxu0
        %2000 = vmatprep.subr.bf16.mxu0 %v1511
        %2001 = vmatpush1.bf16.msra.mxu0 %v1510
        %2002 = vmatprep.subr.bf16.mxu0 %v1515
        %2003 = vmatpush1.bf16.msra.mxu0 %v1514
        %2004 = vmatprep.subr.bf16.mxu0 %v1519
        %2005 = vmatpush1.bf16.msra.mxu0 %v1518
        %2006 = vmatprep.subr.bf16.mxu0 %v1523
        %2007 = vmatpush1.bf16.msra.mxu0 %v1522
        %2008 = vmatprep.subr.bf16.mxu0 %v1527
        %2009 = vmatpush1.bf16.msra.mxu0 %v1526
        %2010 = vmatprep.subr.bf16.mxu0 %v1531
        %2011 = vmatpush1.bf16.msra.mxu0 %v1530
        %2012 = vmatprep.subr.bf16.mxu0 %v1535
        %2013 = vmatpush1.bf16.msra.mxu0 %v1534
        %2014 = vmatprep.subr.bf16.mxu0 %v1539
        %2015 = vmatpush1.bf16.msra.mxu0 %v1538
        %2016 = vmatprep.subr.bf16.mxu0 %v1543
        %2017 = vmatpush1.bf16.msra.mxu0 %v1542
        %2018 = vmatprep.subr.bf16.mxu0 %v1547
        %2019 = vmatpush1.bf16.msra.mxu0 %v1546
        %2020 = vmatprep.subr.bf16.mxu0 %v1551
        %2021 = vmatpush1.bf16.msra.mxu0 %v1550
        %2022 = vmatprep.subr.bf16.mxu0 %v1555
        %2023 = vmatpush1.bf16.msra.mxu0 %v1554
        %2024 = vmatprep.subr.bf16.mxu0 %v1559
        %2025 = vmatpush1.bf16.msra.mxu0 %v1558
        %2026 = vmatprep.subr.bf16.mxu0 %v1563
        %2027 = vmatpush1.bf16.msra.mxu0 %v1562
        %2028 = vmatprep.subr.bf16.mxu0 %v1567
        %2029 = vmatpush1.bf16.msra.mxu0 %v1566
        %2030 = vmatprep.subr.bf16.mxu0 %v1571
        %2031 = vmatpush1.bf16.msra.mxu0 %v1570
        %2032 = vmatprep.mubr.bf16.mxu0 %v325
        %2033 = vmatmul.mubr.bf16.gmra.mrb[0].mxu0 %v324
        %v2034 = vpop.f32.mrb[0].mxu0
        %v2035 = vadd.f32 %v1982, %v2034
        %v2036 = vpop.f32.mrb[0].mxu0
        %v2037 = vadd.f32 %v1984, %v2036
        %v2038 = vpop.f32.mrb[0].mxu0
        %v2039 = vadd.f32 %v1986, %v2038
        %v2040 = vpop.f32.mrb[0].mxu0
        %v2041 = vadd.f32 %v1988, %v2040
        %2042 = vmatprep.mubr.bf16.mxu0 %v333
        %2043 = vmatmul.mubr.bf16.gmra.mrb[0].mxu0 %v332
        %v2044 = vpop.f32.mrb[0].mxu0
        %v2045 = vadd.f32 %v1992, %v2044
        %v2046 = vpop.f32.mrb[0].mxu0
        %v2047 = vadd.f32 %v1994, %v2046
        %v2048 = vpop.f32.mrb[0].mxu0
        %v2049 = vadd.f32 %v1996, %v2048
        %v2050 = vpop.f32.mrb[0].mxu0
        %v2051 = vadd.f32 %v1998, %v2050
        %2052 = vdwg.mxu0
        %2053 = vmatprep.subr.bf16.mxu0 %v1575
        %2054 = vmatpush1.bf16.msra.mxu0 %v1574
        %2055 = vmatprep.subr.bf16.mxu0 %v1579
        %2056 = vmatpush1.bf16.msra.mxu0 %v1578
        %2057 = vmatprep.subr.bf16.mxu0 %v1583
        %2058 = vmatpush1.bf16.msra.mxu0 %v1582
        %2059 = vmatprep.subr.bf16.mxu0 %v1587
        %2060 = vmatpush1.bf16.msra.mxu0 %v1586
        %2061 = vmatprep.subr.bf16.mxu0 %v1591
        %2062 = vmatpush1.bf16.msra.mxu0 %v1590
        %2063 = vmatprep.subr.bf16.mxu0 %v1595
        %2064 = vmatpush1.bf16.msra.mxu0 %v1594
        %2065 = vmatprep.subr.bf16.mxu0 %v1599
        %2066 = vmatpush1.bf16.msra.mxu0 %v1598
        %2067 = vmatprep.subr.bf16.mxu0 %v1603
        %2068 = vmatpush1.bf16.msra.mxu0 %v1602
        %2069 = vmatprep.subr.bf16.mxu0 %v1607
        %2070 = vmatpush1.bf16.msra.mxu0 %v1606
        %2071 = vmatprep.subr.bf16.mxu0 %v1611
        %2072 = vmatpush1.bf16.msra.mxu0 %v1610
        %2073 = vmatprep.subr.bf16.mxu0 %v1615
        %2074 = vmatpush1.bf16.msra.mxu0 %v1614
        %2075 = vmatprep.subr.bf16.mxu0 %v1619
        %2076 = vmatpush1.bf16.msra.mxu0 %v1618
        %2077 = vmatprep.subr.bf16.mxu0 %v1623
        %2078 = vmatpush1.bf16.msra.mxu0 %v1622
        %2079 = vmatprep.subr.bf16.mxu0 %v1627
        %2080 = vmatpush1.bf16.msra.mxu0 %v1626
        %2081 = vmatprep.subr.bf16.mxu0 %v1631
        %2082 = vmatpush1.bf16.msra.mxu0 %v1630
        %2083 = vmatprep.subr.bf16.mxu0 %v1635
        %2084 = vmatpush1.bf16.msra.mxu0 %v1634
        %2085 = vmatprep.mubr.bf16.mxu0 %v327
        %2086 = vmatmul.mubr.bf16.gmra.mrb[0].mxu0 %v326
        %v2087 = vpop.f32.mrb[0].mxu0
        %v2088 = vadd.f32 %v2035, %v2087
        %v2089 = vpop.f32.mrb[0].mxu0
        %v2090 = vadd.f32 %v2037, %v2089
        %v2091 = vpop.f32.mrb[0].mxu0
        %v2092 = vadd.f32 %v2039, %v2091
        %v2093 = vpop.f32.mrb[0].mxu0
        %v2094 = vadd.f32 %v2041, %v2093
        %2095 = vmatprep.mubr.bf16.mxu0 %v335
        %2096 = vmatmul.mubr.bf16.gmra.mrb[0].mxu0 %v334
        %v2097 = vpop.f32.mrb[0].mxu0
        %v2098 = vadd.f32 %v2045, %v2097
        %v2099 = vpop.f32.mrb[0].mxu0
        %v2100 = vadd.f32 %v2047, %v2099
        %v2101 = vpop.f32.mrb[0].mxu0
        %v2102 = vadd.f32 %v2049, %v2101
        %v2103 = vpop.f32.mrb[0].mxu0
        %v2104 = vadd.f32 %v2051, %v2103
        %2105 = vdwg.mxu0
        %2106 = vmatprep.subr.bf16.mxu0 %v1385
        %2107 = vmatpush1.bf16.msra.mxu0 %v1384
        %2108 = vmatprep.subr.bf16.mxu0 %v1389
        %2109 = vmatpush1.bf16.msra.mxu0 %v1388
        %2110 = vmatprep.subr.bf16.mxu0 %v1393
        %2111 = vmatpush1.bf16.msra.mxu0 %v1392
        %2112 = vmatprep.subr.bf16.mxu0 %v1397
        %2113 = vmatpush1.bf16.msra.mxu0 %v1396
        %2114 = vmatprep.subr.bf16.mxu0 %v1401
        %2115 = vmatpush1.bf16.msra.mxu0 %v1400
        %2116 = vmatprep.subr.bf16.mxu0 %v1405
        %2117 = vmatpush1.bf16.msra.mxu0 %v1404
        %2118 = vmatprep.subr.bf16.mxu0 %v1409
        %2119 = vmatpush1.bf16.msra.mxu0 %v1408
        %2120 = vmatprep.subr.bf16.mxu0 %v1413
        %2121 = vmatpush1.bf16.msra.mxu0 %v1412
        %2122 = vmatprep.subr.bf16.mxu0 %v1417
        %2123 = vmatpush1.bf16.msra.mxu0 %v1416
        %2124 = vmatprep.subr.bf16.mxu0 %v1421
        %2125 = vmatpush1.bf16.msra.mxu0 %v1420
        %2126 = vmatprep.subr.bf16.mxu0 %v1425
        %2127 = vmatpush1.bf16.msra.mxu0 %v1424
        %2128 = vmatprep.subr.bf16.mxu0 %v1429
        %2129 = vmatpush1.bf16.msra.mxu0 %v1428
        %2130 = vmatprep.subr.bf16.mxu0 %v1433
        %2131 = vmatpush1.bf16.msra.mxu0 %v1432
        %2132 = vmatprep.subr.bf16.mxu0 %v1437
        %2133 = vmatpush1.bf16.msra.mxu0 %v1436
        %2134 = vmatprep.subr.bf16.mxu0 %v1441
        %2135 = vmatpush1.bf16.msra.mxu0 %v1440
        %2136 = vmatprep.subr.bf16.mxu0 %v1445
        %2137 = vmatpush1.bf16.msra.mxu0 %v1444
        %2138 = vmatprep.mubr.bf16.mxu0 %v321
        %2139 = vmatmul.mubr.bf16.gmra.mrb[0].mxu0 %v320
        %v2140 = vpop.f32.mrb[0].mxu0
        %v2141 = vadd.f32 %v605, %v2140
        %v2142 = vpop.f32.mrb[0].mxu0
        %v2143 = vadd.f32 %v609, %v2142
        %v2144 = vpop.f32.mrb[0].mxu0
        %v2145 = vadd.f32 %v605, %v2144
        %v2146 = vpop.f32.mrb[0].mxu0
        %v2147 = vadd.f32 %v609, %v2146
        %2148 = vmatprep.mubr.bf16.mxu0 %v329
        %2149 = vmatmul.mubr.bf16.gmra.mrb[0].mxu0 %v328
        %v2150 = vpop.f32.mrb[0].mxu0
        %v2151 = vadd.f32 %v605, %v2150
        %v2152 = vpop.f32.mrb[0].mxu0
        %v2153 = vadd.f32 %v609, %v2152
        %v2154 = vpop.f32.mrb[0].mxu0
        %v2155 = vadd.f32 %v605, %v2154
        %v2156 = vpop.f32.mrb[0].mxu0
        %v2157 = vadd.f32 %v609, %v2156
        %2158 = vdwg.mxu0
        %2159 = vmatprep.subr.bf16.mxu0 %v1449
        %2160 = vmatpush1.bf16.msra.mxu0 %v1448
        %2161 = vmatprep.subr.bf16.mxu0 %v1453
        %2162 = vmatpush1.bf16.msra.mxu0 %v1452
        %2163 = vmatprep.subr.bf16.mxu0 %v1457
        %2164 = vmatpush1.bf16.msra.mxu0 %v1456
        %2165 = vmatprep.subr.bf16.mxu0 %v1461
        %2166 = vmatpush1.bf16.msra.mxu0 %v1460
        %2167 = vmatprep.subr.bf16.mxu0 %v1465
        %2168 = vmatpush1.bf16.msra.mxu0 %v1464
        %2169 = vmatprep.subr.bf16.mxu0 %v1469
        %2170 = vmatpush1.bf16.msra.mxu0 %v1468
        %2171 = vmatprep.subr.bf16.mxu0 %v1473
        %2172 = vmatpush1.bf16.msra.mxu0 %v1472
        %2173 = vmatprep.subr.bf16.mxu0 %v1477
        %2174 = vmatpush1.bf16.msra.mxu0 %v1476
        %2175 = vmatprep.subr.bf16.mxu0 %v1481
        %2176 = vmatpush1.bf16.msra.mxu0 %v1480
        %2177 = vmatprep.subr.bf16.mxu0 %v1485
        %2178 = vmatpush1.bf16.msra.mxu0 %v1484
        %2179 = vmatprep.subr.bf16.mxu0 %v1489
        %2180 = vmatpush1.bf16.msra.mxu0 %v1488
        %2181 = vmatprep.subr.bf16.mxu0 %v1493
        %2182 = vmatpush1.bf16.msra.mxu0 %v1492
        %2183 = vmatprep.subr.bf16.mxu0 %v1497
        %2184 = vmatpush1.bf16.msra.mxu0 %v1496
        %2185 = vmatprep.subr.bf16.mxu0 %v1501
        %2186 = vmatpush1.bf16.msra.mxu0 %v1500
        %2187 = vmatprep.subr.bf16.mxu0 %v1505
        %2188 = vmatpush1.bf16.msra.mxu0 %v1504
        %2189 = vmatprep.subr.bf16.mxu0 %v1509
        %2190 = vmatpush1.bf16.msra.mxu0 %v1508
        %2191 = vmatprep.mubr.bf16.mxu0 %v323
        %2192 = vmatmul.mubr.bf16.gmra.mrb[0].mxu0 %v322
        %v2193 = vpop.f32.mrb[0].mxu0
        %v2194 = vadd.f32 %v2141, %v2193
        %v2195 = vpop.f32.mrb[0].mxu0
        %v2196 = vadd.f32 %v2143, %v2195
        %v2197 = vpop.f32.mrb[0].mxu0
        %v2198 = vadd.f32 %v2145, %v2197
        %v2199 = vpop.f32.mrb[0].mxu0
        %v2200 = vadd.f32 %v2147, %v2199
        %2201 = vmatprep.mubr.bf16.mxu0 %v331
        %2202 = vmatmul.mubr.bf16.gmra.mrb[0].mxu0 %v330
        %v2203 = vpop.f32.mrb[0].mxu0
        %v2204 = vadd.f32 %v2151, %v2203
        %v2205 = vpop.f32.mrb[0].mxu0
        %v2206 = vadd.f32 %v2153, %v2205
        %v2207 = vpop.f32.mrb[0].mxu0
        %v2208 = vadd.f32 %v2155, %v2207
        %v2209 = vpop.f32.mrb[0].mxu0
        %v2210 = vadd.f32 %v2157, %v2209
        %2211 = vdwg.mxu0
        %2212 = vmatprep.subr.bf16.mxu0 %v1513
        %2213 = vmatpush1.bf16.msra.mxu0 %v1512
        %2214 = vmatprep.subr.bf16.mxu0 %v1517
        %2215 = vmatpush1.bf16.msra.mxu0 %v1516
        %2216 = vmatprep.subr.bf16.mxu0 %v1521
        %2217 = vmatpush1.bf16.msra.mxu0 %v1520
        %2218 = vmatprep.subr.bf16.mxu0 %v1525
        %2219 = vmatpush1.bf16.msra.mxu0 %v1524
        %2220 = vmatprep.subr.bf16.mxu0 %v1529
        %2221 = vmatpush1.bf16.msra.mxu0 %v1528
        %2222 = vmatprep.subr.bf16.mxu0 %v1533
        %2223 = vmatpush1.bf16.msra.mxu0 %v1532
        %2224 = vmatprep.subr.bf16.mxu0 %v1537
        %2225 = vmatpush1.bf16.msra.mxu0 %v1536
        %2226 = vmatprep.subr.bf16.mxu0 %v1541
        %2227 = vmatpush1.bf16.msra.mxu0 %v1540
        %2228 = vmatprep.subr.bf16.mxu0 %v1545
        %2229 = vmatpush1.bf16.msra.mxu0 %v1544
        %2230 = vmatprep.subr.bf16.mxu0 %v1549
        %2231 = vmatpush1.bf16.msra.mxu0 %v1548
        %2232 = vmatprep.subr.bf16.mxu0 %v1553
        %2233 = vmatpush1.bf16.msra.mxu0 %v1552
        %2234 = vmatprep.subr.bf16.mxu0 %v1557
        %2235 = vmatpush1.bf16.msra.mxu0 %v1556
        %2236 = vmatprep.subr.bf16.mxu0 %v1561
        %2237 = vmatpush1.bf16.msra.mxu0 %v1560
        %2238 = vmatprep.subr.bf16.mxu0 %v1565
        %2239 = vmatpush1.bf16.msra.mxu0 %v1564
        %2240 = vmatprep.subr.bf16.mxu0 %v1569
        %2241 = vmatpush1.bf16.msra.mxu0 %v1568
        %2242 = vmatprep.subr.bf16.mxu0 %v1573
        %2243 = vmatpush1.bf16.msra.mxu0 %v1572
        %2244 = vmatprep.mubr.bf16.mxu0 %v325
        %2245 = vmatmul.mubr.bf16.gmra.mrb[0].mxu0 %v324
        %v2246 = vpop.f32.mrb[0].mxu0
        %v2247 = vadd.f32 %v2194, %v2246
        %v2248 = vpop.f32.mrb[0].mxu0
        %v2249 = vadd.f32 %v2196, %v2248
        %v2250 = vpop.f32.mrb[0].mxu0
        %v2251 = vadd.f32 %v2198, %v2250
        %v2252 = vpop.f32.mrb[0].mxu0
        %v2253 = vadd.f32 %v2200, %v2252
        %2254 = vmatprep.mubr.bf16.mxu0 %v333
        %2255 = vmatmul.mubr.bf16.gmra.mrb[0].mxu0 %v332
        %v2256 = vpop.f32.mrb[0].mxu0
        %v2257 = vadd.f32 %v2204, %v2256
        %v2258 = vpop.f32.mrb[0].mxu0
        %v2259 = vadd.f32 %v2206, %v2258
        %v2260 = vpop.f32.mrb[0].mxu0
        %v2261 = vadd.f32 %v2208, %v2260
        %v2262 = vpop.f32.mrb[0].mxu0
        %v2263 = vadd.f32 %v2210, %v2262
        %2264 = vdwg.mxu0
        %2265 = vmatprep.subr.bf16.mxu0 %v1577
        %2266 = vmatpush1.bf16.msra.mxu0 %v1576
        %2267 = vmatprep.subr.bf16.mxu0 %v1581
        %2268 = vmatpush1.bf16.msra.mxu0 %v1580
        %2269 = vmatprep.subr.bf16.mxu0 %v1585
        %2270 = vmatpush1.bf16.msra.mxu0 %v1584
        %2271 = vmatprep.subr.bf16.mxu0 %v1589
        %2272 = vmatpush1.bf16.msra.mxu0 %v1588
        %2273 = vmatprep.subr.bf16.mxu0 %v1593
        %2274 = vmatpush1.bf16.msra.mxu0 %v1592
        %2275 = vmatprep.subr.bf16.mxu0 %v1597
        %2276 = vmatpush1.bf16.msra.mxu0 %v1596
        %2277 = vmatprep.subr.bf16.mxu0 %v1601
        %2278 = vmatpush1.bf16.msra.mxu0 %v1600
        %2279 = vmatprep.subr.bf16.mxu0 %v1605
        %2280 = vmatpush1.bf16.msra.mxu0 %v1604
        %2281 = vmatprep.subr.bf16.mxu0 %v1609
        %2282 = vmatpush1.bf16.msra.mxu0 %v1608
        %2283 = vmatprep.subr.bf16.mxu0 %v1613
        %2284 = vmatpush1.bf16.msra.mxu0 %v1612
        %2285 = vmatprep.subr.bf16.mxu0 %v1617
        %2286 = vmatpush1.bf16.msra.mxu0 %v1616
        %2287 = vmatprep.subr.bf16.mxu0 %v1621
        %2288 = vmatpush1.bf16.msra.mxu0 %v1620
        %2289 = vmatprep.subr.bf16.mxu0 %v1625
        %2290 = vmatpush1.bf16.msra.mxu0 %v1624
        %2291 = vmatprep.subr.bf16.mxu0 %v1629
        %2292 = vmatpush1.bf16.msra.mxu0 %v1628
        %2293 = vmatprep.subr.bf16.mxu0 %v1633
        %2294 = vmatpush1.bf16.msra.mxu0 %v1632
        %2295 = vmatprep.subr.bf16.mxu0 %v1637
        %2296 = vmatpush1.bf16.msra.mxu0 %v1636
        %2297 = vmatprep.mubr.bf16.mxu0 %v327
        %2298 = vmatmul.mubr.bf16.gmra.mrb[0].mxu0 %v326
        %v2299 = vpop.f32.mrb[0].mxu0
        %v2300 = vadd.f32 %v2247, %v2299
        %v2301 = vpop.f32.mrb[0].mxu0
        %v2302 = vadd.f32 %v2249, %v2301
        %v2303 = vpop.f32.mrb[0].mxu0
        %v2304 = vadd.f32 %v2251, %v2303
        %v2305 = vpop.f32.mrb[0].mxu0
        %v2306 = vadd.f32 %v2253, %v2305
        %2307 = vmatprep.mubr.bf16.mxu0 %v335
        %2308 = vmatmul.mubr.bf16.gmra.mrb[0].mxu0 %v334
        %v2309 = vpop.f32.mrb[0].mxu0
        %v2310 = vadd.f32 %v2257, %v2309
        %v2311 = vpop.f32.mrb[0].mxu0
        %v2312 = vadd.f32 %v2259, %v2311
        %v2313 = vpop.f32.mrb[0].mxu0
        %v2314 = vadd.f32 %v2261, %v2313
        %v2315 = vpop.f32.mrb[0].mxu0
        %v2316 = vadd.f32 %v2263, %v2315
        %2317 = vdwg.mxu0
        %v2318 = vmax.f32 %v2088, 0.0
        %v2319 = vmax.f32 %v2090, 0.0
        %v2320 = vmax.f32 %v2300, 0.0
        %v2321 = vmax.f32 %v2302, 0.0
        %v2322 = vmax.f32 %v2092, 0.0
        %v2323 = vmax.f32 %v2094, 0.0
        %v2324 = vmax.f32 %v2304, 0.0
        %v2325 = vmax.f32 %v2306, 0.0
        %v2326 = vmax.f32 %v2098, 0.0
        %v2327 = vmax.f32 %v2100, 0.0
        %v2328 = vmax.f32 %v2310, 0.0
        %v2329 = vmax.f32 %v2312, 0.0
        %v2330 = vmax.f32 %v2102, 0.0
        %v2331 = vmax.f32 %v2104, 0.0
        %v2332 = vmax.f32 %v2314, 0.0
        %v2333 = vmax.f32 %v2316, 0.0
        %v2334 = vpack.c.bf16 %v2322, %v2318
        %v2335 = vpack.c.bf16 %v2323, %v2319
        %v2336 = vpack.c.bf16 %v2324, %v2320
        %v2337 = vpack.c.bf16 %v2325, %v2321
        %v2338 = vpack.c.bf16 %v2330, %v2326
        %v2339 = vpack.c.bf16 %v2331, %v2327
        %v2340 = vpack.c.bf16 %v2332, %v2328
        %v2341 = vpack.c.bf16 %v2333, %v2329
        %v2342 = vld [vmem:[#allocation6] sm:$0xf]
        %v2343 = vld [vmem:[#allocation6 + $0x4] sm:$0xf]
        %v2344 = vld [vmem:[#allocation6 + $0x8] sm:$0xf]
        %v2345 = vld [vmem:[#allocation6 + $0xc] sm:$0xf]
        %v2346 = vld [vmem:[#allocation6 + $0x10] sm:$0xf]
        %v2347 = vld [vmem:[#allocation6 + $0x14] sm:$0xf]
        %v2348 = vld [vmem:[#allocation6 + $0x18] sm:$0xf]
        %v2349 = vld [vmem:[#allocation6 + $0x1c] sm:$0xf]
        %v2350 = vld [vmem:[#allocation6 + $0x20] sm:$0xf]
        %v2351 = vld [vmem:[#allocation6 + $0x24] sm:$0xf]
        %v2352 = vld [vmem:[#allocation6 + $0x28] sm:$0xf]
        %v2353 = vld [vmem:[#allocation6 + $0x2c] sm:$0xf]
        %v2354 = vld [vmem:[#allocation6 + $0x30] sm:$0xf]
        %v2355 = vld [vmem:[#allocation6 + $0x34] sm:$0xf]
        %v2356 = vld [vmem:[#allocation6 + $0x38] sm:$0xf]
        %v2357 = vld [vmem:[#allocation6 + $0x3c] sm:$0xf]
        %v2358 = vld [vmem:[#allocation6 + $0x40] sm:$0xf]
        %v2359 = vld [vmem:[#allocation6 + $0x44] sm:$0xf]
        %v2360 = vld [vmem:[#allocation6 + $0x48] sm:$0xf]
        %v2361 = vld [vmem:[#allocation6 + $0x4c] sm:$0xf]
        %v2362 = vld [vmem:[#allocation6 + $0x50] sm:$0xf]
        %v2363 = vld [vmem:[#allocation6 + $0x54] sm:$0xf]
        %v2364 = vld [vmem:[#allocation6 + $0x58] sm:$0xf]
        %v2365 = vld [vmem:[#allocation6 + $0x5c] sm:$0xf]
        %v2366 = vld [vmem:[#allocation6 + $0x60] sm:$0xf]
        %v2367 = vld [vmem:[#allocation6 + $0x64] sm:$0xf]
        %v2368 = vld [vmem:[#allocation6 + $0x68] sm:$0xf]
        %v2369 = vld [vmem:[#allocation6 + $0x6c] sm:$0xf]
        %v2370 = vld [vmem:[#allocation6 + $0x70] sm:$0xf]
        %v2371 = vld [vmem:[#allocation6 + $0x74] sm:$0xf]
        %v2372 = vld [vmem:[#allocation6 + $0x78] sm:$0xf]
        %v2373 = vld [vmem:[#allocation6 + $0x7c] sm:$0xf]
        %v2374 = vld [vmem:[#allocation6 + $0x80] sm:$0xf]
        %v2375 = vld [vmem:[#allocation6 + $0x84] sm:$0xf]
        %v2376 = vld [vmem:[#allocation6 + $0x88] sm:$0xf]
        %v2377 = vld [vmem:[#allocation6 + $0x8c] sm:$0xf]
        %v2378 = vld [vmem:[#allocation6 + $0x90] sm:$0xf]
        %v2379 = vld [vmem:[#allocation6 + $0x94] sm:$0xf]
        %v2380 = vld [vmem:[#allocation6 + $0x98] sm:$0xf]
        %v2381 = vld [vmem:[#allocation6 + $0x9c] sm:$0xf]
        %v2382 = vld [vmem:[#allocation6 + $0xa0] sm:$0xf]
        %v2383 = vld [vmem:[#allocation6 + $0xa4] sm:$0xf]
        %v2384 = vld [vmem:[#allocation6 + $0xa8] sm:$0xf]
        %v2385 = vld [vmem:[#allocation6 + $0xac] sm:$0xf]
        %v2386 = vld [vmem:[#allocation6 + $0xb0] sm:$0xf]
        %v2387 = vld [vmem:[#allocation6 + $0xb4] sm:$0xf]
        %v2388 = vld [vmem:[#allocation6 + $0xb8] sm:$0xf]
        %v2389 = vld [vmem:[#allocation6 + $0xbc] sm:$0xf]
        %v2390 = vld [vmem:[#allocation6 + $0xc0] sm:$0xf]
        %v2391 = vld [vmem:[#allocation6 + $0xc4] sm:$0xf]
        %v2392 = vld [vmem:[#allocation6 + $0xc8] sm:$0xf]
        %v2393 = vld [vmem:[#allocation6 + $0xcc] sm:$0xf]
        %v2394 = vld [vmem:[#allocation6 + $0xd0] sm:$0xf]
        %v2395 = vld [vmem:[#allocation6 + $0xd4] sm:$0xf]
        %v2396 = vld [vmem:[#allocation6 + $0xd8] sm:$0xf]
        %v2397 = vld [vmem:[#allocation6 + $0xdc] sm:$0xf]
        %v2398 = vld [vmem:[#allocation6 + $0xe0] sm:$0xf]
        %v2399 = vld [vmem:[#allocation6 + $0xe4] sm:$0xf]
        %v2400 = vld [vmem:[#allocation6 + $0xe8] sm:$0xf]
        %v2401 = vld [vmem:[#allocation6 + $0xec] sm:$0xf]
        %v2402 = vld [vmem:[#allocation6 + $0xf0] sm:$0xf]
        %v2403 = vld [vmem:[#allocation6 + $0xf4] sm:$0xf]
        %v2404 = vld [vmem:[#allocation6 + $0xf8] sm:$0xf]
        %v2405 = vld [vmem:[#allocation6 + $0xfc] sm:$0xf]
        %v2406 = vld [vmem:[%s4] sm:$0x1]
        %v2408 = vlaneseq
        %v2409 = vshrl.u32 %v2408, 7
        %v2410 = vsub.s32 0, %v2409
        %v2411 = vrot.slane %v2406, %v2410
        %v2477 = vunpack.c.l.b16 %v2342
        %v2478 = vunpack.c.l.b16 %v2343
        %v2479 = vunpack.c.l.b16 %v2344
        %v2480 = vunpack.c.l.b16 %v2345
        %v2481 = vunpack.c.l.b16 %v2346
        %v2482 = vunpack.c.l.b16 %v2347
        %v2483 = vunpack.c.l.b16 %v2348
        %v2484 = vunpack.c.l.b16 %v2349
        %v2485 = vunpack.c.l.b16 %v2350
        %v2486 = vunpack.c.l.b16 %v2351
        %v2487 = vunpack.c.l.b16 %v2352
        %v2488 = vunpack.c.l.b16 %v2353
        %v2489 = vunpack.c.l.b16 %v2354
        %v2490 = vunpack.c.l.b16 %v2355
        %v2491 = vunpack.c.l.b16 %v2356
        %v2492 = vunpack.c.l.b16 %v2357
        %v2493 = vunpack.c.l.b16 %v2358
        %v2494 = vunpack.c.l.b16 %v2359
        %v2495 = vunpack.c.l.b16 %v2360
        %v2496 = vunpack.c.l.b16 %v2361
        %v2497 = vunpack.c.l.b16 %v2362
        %v2498 = vunpack.c.l.b16 %v2363
        %v2499 = vunpack.c.l.b16 %v2364
        %v2500 = vunpack.c.l.b16 %v2365
        %v2501 = vunpack.c.l.b16 %v2366
        %v2502 = vunpack.c.l.b16 %v2367
        %v2503 = vunpack.c.l.b16 %v2368
        %v2504 = vunpack.c.l.b16 %v2369
        %v2505 = vunpack.c.l.b16 %v2370
        %v2506 = vunpack.c.l.b16 %v2371
        %v2507 = vunpack.c.l.b16 %v2372
        %v2508 = vunpack.c.l.b16 %v2373
        %v2509 = vunpack.c.l.b16 %v2374
        %v2510 = vunpack.c.l.b16 %v2375
        %v2511 = vunpack.c.l.b16 %v2376
        %v2512 = vunpack.c.l.b16 %v2377
        %v2513 = vunpack.c.l.b16 %v2378
        %v2514 = vunpack.c.l.b16 %v2379
        %v2515 = vunpack.c.l.b16 %v2380
        %v2516 = vunpack.c.l.b16 %v2381
        %v2517 = vunpack.c.l.b16 %v2382
        %v2518 = vunpack.c.l.b16 %v2383
        %v2519 = vunpack.c.l.b16 %v2384
        %v2520 = vunpack.c.l.b16 %v2385
        %v2521 = vunpack.c.l.b16 %v2386
        %v2522 = vunpack.c.l.b16 %v2387
        %v2523 = vunpack.c.l.b16 %v2388
        %v2524 = vunpack.c.l.b16 %v2389
        %v2525 = vunpack.c.l.b16 %v2390
        %v2526 = vunpack.c.l.b16 %v2391
        %v2527 = vunpack.c.l.b16 %v2392
        %v2528 = vunpack.c.l.b16 %v2393
        %v2529 = vunpack.c.l.b16 %v2394
        %v2530 = vunpack.c.l.b16 %v2395
        %v2531 = vunpack.c.l.b16 %v2396
        %v2532 = vunpack.c.l.b16 %v2397
        %v2533 = vunpack.c.l.b16 %v2398
        %v2534 = vunpack.c.l.b16 %v2399
        %v2535 = vunpack.c.l.b16 %v2400
        %v2536 = vunpack.c.l.b16 %v2401
        %v2537 = vunpack.c.l.b16 %v2402
        %v2538 = vunpack.c.l.b16 %v2403
        %v2539 = vunpack.c.l.b16 %v2404
        %v2540 = vunpack.c.l.b16 %v2405
        %v2541 = vpack.c.b16 %v2478, %v2477
        %v2542 = vpack.c.b16 %v2480, %v2479
        %v2543 = vpack.c.b16 %v2482, %v2481
        %v2544 = vpack.c.b16 %v2484, %v2483
        %v2545 = vpack.c.b16 %v2486, %v2485
        %v2546 = vpack.c.b16 %v2488, %v2487
        %v2547 = vpack.c.b16 %v2490, %v2489
        %v2548 = vpack.c.b16 %v2492, %v2491
        %v2549 = vpack.c.b16 %v2494, %v2493
        %v2550 = vpack.c.b16 %v2496, %v2495
        %v2551 = vpack.c.b16 %v2498, %v2497
        %v2552 = vpack.c.b16 %v2500, %v2499
        %v2553 = vpack.c.b16 %v2502, %v2501
        %v2554 = vpack.c.b16 %v2504, %v2503
        %v2555 = vpack.c.b16 %v2506, %v2505
        %v2556 = vpack.c.b16 %v2508, %v2507
        %v2557 = vpack.c.b16 %v2510, %v2509
        %v2558 = vpack.c.b16 %v2512, %v2511
        %v2559 = vpack.c.b16 %v2514, %v2513
        %v2560 = vpack.c.b16 %v2516, %v2515
        %v2561 = vpack.c.b16 %v2518, %v2517
        %v2562 = vpack.c.b16 %v2520, %v2519
        %v2563 = vpack.c.b16 %v2522, %v2521
        %v2564 = vpack.c.b16 %v2524, %v2523
        %v2565 = vpack.c.b16 %v2526, %v2525
        %v2566 = vpack.c.b16 %v2528, %v2527
        %v2567 = vpack.c.b16 %v2530, %v2529
        %v2568 = vpack.c.b16 %v2532, %v2531
        %v2569 = vpack.c.b16 %v2534, %v2533
        %v2570 = vpack.c.b16 %v2536, %v2535
        %v2571 = vpack.c.b16 %v2538, %v2537
        %v2572 = vpack.c.b16 %v2540, %v2539
        %2605 = vmatprep.subr.bf16.mxu0 0
        %2606 = vmatpush1.bf16.msra.mxu0 %v2541
        %2607 = vmatprep.subr.bf16.mxu0 0
        %2608 = vmatpush1.bf16.msra.mxu0 %v2542
        %2609 = vmatprep.subr.bf16.mxu0 0
        %2610 = vmatpush1.bf16.msra.mxu0 %v2543
        %2611 = vmatprep.subr.bf16.mxu0 0
        %2612 = vmatpush1.bf16.msra.mxu0 %v2544
        %2613 = vmatprep.subr.bf16.mxu0 0
        %2614 = vmatpush1.bf16.msra.mxu0 %v2545
        %2615 = vmatprep.subr.bf16.mxu0 0
        %2616 = vmatpush1.bf16.msra.mxu0 %v2546
        %2617 = vmatprep.subr.bf16.mxu0 0
        %2618 = vmatpush1.bf16.msra.mxu0 %v2547
        %2619 = vmatprep.subr.bf16.mxu0 0
        %2620 = vmatpush1.bf16.msra.mxu0 %v2548
        %2621 = vmatprep.subr.bf16.mxu0 0
        %2622 = vmatpush1.bf16.msra.mxu0 %v2549
        %2623 = vmatprep.subr.bf16.mxu0 0
        %2624 = vmatpush1.bf16.msra.mxu0 %v2550
        %2625 = vmatprep.subr.bf16.mxu0 0
        %2626 = vmatpush1.bf16.msra.mxu0 %v2551
        %2627 = vmatprep.subr.bf16.mxu0 0
        %2628 = vmatpush1.bf16.msra.mxu0 %v2552
        %2629 = vmatprep.subr.bf16.mxu0 0
        %2630 = vmatpush1.bf16.msra.mxu0 %v2553
        %2631 = vmatprep.subr.bf16.mxu0 0
        %2632 = vmatpush1.bf16.msra.mxu0 %v2554
        %2633 = vmatprep.subr.bf16.mxu0 0
        %2634 = vmatpush1.bf16.msra.mxu0 %v2555
        %2635 = vmatprep.subr.bf16.mxu0 0
        %2636 = vmatpush1.bf16.msra.mxu0 %v2556
        %2637 = vmatprep.mubr.bf16.mxu0 %v2335
        %2638 = vmatmul.mubr.bf16.gmra.mrb[0].mxu0 %v2334
        %v2639 = vpop.f32.mrb[0].mxu0
        %v2640 = vadd.f32 %v2411, %v2639
        %v2641 = vpop.f32.mrb[0].mxu0
        %v2642 = vpop.f32.mrb[0].mxu0
        %v2643 = vadd.f32 %v2411, %v2642
        %v2644 = vpop.f32.mrb[0].mxu0
        %2645 = vmatprep.mubr.bf16.mxu0 %v2339
        %2646 = vmatmul.mubr.bf16.gmra.mrb[0].mxu0 %v2338
        %v2647 = vpop.f32.mrb[0].mxu0
        %v2648 = vadd.f32 %v2411, %v2647
        %v2649 = vpop.f32.mrb[0].mxu0
        %v2650 = vpop.f32.mrb[0].mxu0
        %v2651 = vadd.f32 %v2411, %v2650
        %v2652 = vpop.f32.mrb[0].mxu0
        %2653 = vdwg.mxu0
        %2654 = vmatprep.subr.bf16.mxu0 0
        %2655 = vmatpush1.bf16.msra.mxu0 %v2557
        %2656 = vmatprep.subr.bf16.mxu0 0
        %2657 = vmatpush1.bf16.msra.mxu0 %v2558
        %2658 = vmatprep.subr.bf16.mxu0 0
        %2659 = vmatpush1.bf16.msra.mxu0 %v2559
        %2660 = vmatprep.subr.bf16.mxu0 0
        %2661 = vmatpush1.bf16.msra.mxu0 %v2560
        %2662 = vmatprep.subr.bf16.mxu0 0
        %2663 = vmatpush1.bf16.msra.mxu0 %v2561
        %2664 = vmatprep.subr.bf16.mxu0 0
        %2665 = vmatpush1.bf16.msra.mxu0 %v2562
        %2666 = vmatprep.subr.bf16.mxu0 0
        %2667 = vmatpush1.bf16.msra.mxu0 %v2563
        %2668 = vmatprep.subr.bf16.mxu0 0
        %2669 = vmatpush1.bf16.msra.mxu0 %v2564
        %2670 = vmatprep.subr.bf16.mxu0 0
        %2671 = vmatpush1.bf16.msra.mxu0 %v2565
        %2672 = vmatprep.subr.bf16.mxu0 0
        %2673 = vmatpush1.bf16.msra.mxu0 %v2566
        %2674 = vmatprep.subr.bf16.mxu0 0
        %2675 = vmatpush1.bf16.msra.mxu0 %v2567
        %2676 = vmatprep.subr.bf16.mxu0 0
        %2677 = vmatpush1.bf16.msra.mxu0 %v2568
        %2678 = vmatprep.subr.bf16.mxu0 0
        %2679 = vmatpush1.bf16.msra.mxu0 %v2569
        %2680 = vmatprep.subr.bf16.mxu0 0
        %2681 = vmatpush1.bf16.msra.mxu0 %v2570
        %2682 = vmatprep.subr.bf16.mxu0 0
        %2683 = vmatpush1.bf16.msra.mxu0 %v2571
        %2684 = vmatprep.subr.bf16.mxu0 0
        %2685 = vmatpush1.bf16.msra.mxu0 %v2572
        %2686 = vmatprep.mubr.bf16.mxu0 %v2337
        %2687 = vmatmul.mubr.bf16.gmra.mrb[0].mxu0 %v2336
        %v2688 = vpop.f32.mrb[0].mxu0
        %v2689 = vadd.f32 %v2640, %v2688
        %v2690 = vpop.f32.mrb[0].mxu0
        %v2691 = vpop.f32.mrb[0].mxu0
        %v2692 = vadd.f32 %v2643, %v2691
        %v2693 = vpop.f32.mrb[0].mxu0
        %2694 = vmatprep.mubr.bf16.mxu0 %v2341
        %2695 = vmatmul.mubr.bf16.gmra.mrb[0].mxu0 %v2340
        %v2696 = vpop.f32.mrb[0].mxu0
        %v2697 = vadd.f32 %v2648, %v2696
        %v2698 = vpop.f32.mrb[0].mxu0
        %v2699 = vpop.f32.mrb[0].mxu0
        %v2700 = vadd.f32 %v2651, %v2699
        %v2701 = vpop.f32.mrb[0].mxu0
        %2702 = vdwg.mxu0
        %v2703 = vlaneseq
        %v2704 = vand.u32 %v2703, 127
        %vm2705 = vcmp.ge.s32.totalorder %v2704, 2
        %vm2706 = vcmp.lt.s32.totalorder %v2704, 4
        %vm2707 = vmand %vm2705, %vm2706
        %v2708 = vsel %vm2707, %v2689, -1e+30
        %v2709 = vsel %vm2707, %v2692, -1e+30
        %v2710 = vsel %vm2707, %v2697, -1e+30
        %v2711 = vsel %vm2707, %v2700, -1e+30
        %2712 = vmax.xlane.f32.xlu0 %v2708
        %v2713 = vpop.xlane.xlu0 %2712
        %2714 = vmax.xlane.f32.xlu0 %v2709
        %v2715 = vpop.xlane.xlu0 %2714
        %2716 = vmax.xlane.f32.xlu0 %v2710
        %v2717 = vpop.xlane.xlu0 %2716
        %2718 = vmax.xlane.f32.xlu0 %v2711
        %v2719 = vpop.xlane.xlu0 %2718
        %v2720 = vsub.f32 %v2708, %v2713
        %v2721 = vsub.f32 %v2709, %v2715
        %v2722 = vsub.f32 %v2710, %v2717
        %v2723 = vsub.f32 %v2711, %v2719
        %v2724 = vmul.f32 %v2720, 1.442695
        %v2725 = vpow.pop %v2724
        %v2726 = vmul.f32 %v2721, 1.442695
        %v2727 = vpow.pop %v2726
        %v2728 = vmul.f32 %v2722, 1.442695
        %v2729 = vpow.pop %v2728
        %v2730 = vmul.f32 %v2723, 1.442695
        %v2731 = vpow.pop %v2730
        %v2732 = vsel %vm2707, %v2725, 0.0
        %v2733 = vsel %vm2707, %v2727, 0.0
        %v2734 = vsel %vm2707, %v2729, 0.0
        %v2735 = vsel %vm2707, %v2731, 0.0
        %2736 = vadd.xlane.f32.xlu0 %v2732
        %v2737 = vpop.xlane.xlu0 %2736
        %2738 = vadd.xlane.f32.xlu0 %v2733
        %v2739 = vpop.xlane.xlu0 %2738
        %2740 = vadd.xlane.f32.xlu0 %v2734
        %v2741 = vpop.xlane.xlu0 %2740
        %2742 = vadd.xlane.f32.xlu0 %v2735
        %v2743 = vpop.xlane.xlu0 %2742
        %v2744 = vrcp.pop %v2737
        %v2745 = vmul.f32 %v2732, %v2744
        %v2746 = vrcp.pop %v2739
        %v2747 = vmul.f32 %v2733, %v2746
        %v2748 = vrcp.pop %v2741
        %v2749 = vmul.f32 %v2734, %v2748
        %v2750 = vrcp.pop %v2743
        %v2751 = vmul.f32 %v2735, %v2750
        %vm2752 = vcmp.lt.s32.totalorder %v2704, 2
        %v2753 = vsel %vm2752, %v2689, %v2745
        %v2754 = vsel %vm2752, %v2692, %v2747
        %v2755 = vsel %vm2752, %v2697, %v2749
        %v2756 = vsel %vm2752, %v2700, %v2751
        %v2757 = vpack.c.bf16 %v2754, %v2753
        %v2758 = vpack.c.bf16 %v2756, %v2755
        %v2761 = vunpack.c.l.b16 %v2757
        %v2762 = vunpack.c.h.b16 %v2757
        %v2763 = vunpack.c.l.b16 %v2758
        %v2764 = vunpack.c.h.b16 %v2758
        %v2765 = vpack.c.b16 %v2761, %v2761
        %v2766 = vpack.c.b16 %v2762, %v2762
        %v2767 = vpack.c.b16 %v2763, %v2763
        %v2768 = vpack.c.b16 %v2764, %v2764
        %2773 = vst [vmem:[%s275] sm:$0xf] %v2765
        %2774 = vst [vmem:[%s275 + $0x4] sm:$0xf] %v2766
        %2775 = vst [vmem:[%s275 + $0x8] sm:$0xf] %v2767
        %2776 = vst [vmem:[%s275 + $0xc] sm:$0xf] %v2768
        %s2777 = sand.u32 %s138, 1
        %s2778 = sand.u32 %s138, 1
        %s2779 = smul.addr %s2778, 16
        %s2780 = scalar_lea.vmem [#allocation7], %s2779
        // Predicated region
        $region53: #{mil_fc_forward.1} parent=39 // pred_check
          %p2781 = pneg %p148
        $region54: #{mil_fc_forward.1} parent=39 // pred_check_branch
          %2783 = sbr.rel (%p2781) target = $region56
        $region55: #{mil_fc_forward.1} parent=39 // pred_region
          %s2784 = smul.u32 4, %s20
          %s2785 = ssub.s32 5, %s2784
          %p2786 = scmp.lt.s32.totalorder %s2785, 4
          %s2787 = scalar_select %p2786, %s2785, 4
          %s2788 = smul.u32 64, %s2787
          %p2789 = scmp.ne.s32.totalorder 0, %s2788
          %s2790 = smul.addr %s2784, 4
          %s2791 = scalar_lea.vmem %s5, %s2790
          // Predicated region
          $region57: #{mil_fc_forward.1} parent=55 // pred_check
            %p2792 = pneg %p2789
          $region58: #{mil_fc_forward.1} parent=55 // pred_check_branch
            %2794 = sbr.rel (%p2792) target = $region60
          $region59: #{mil_fc_forward.1} parent=55 // pred_region
            // Predicated region
            $region61: #{mil_fc_forward.1} parent=59 // pred_check
              _
            $region62: #{mil_fc_forward.1} parent=59 // pred_check_branch
              %2796 = sbr.rel target = $region64
            $region63: #{mil_fc_forward.1} parent=59 // pred_region
              // Predicated region
              $region83: #{mil_fc_forward.1} parent=63 // pred_check
                _
              $region84: #{mil_fc_forward.1} parent=63 // pred_check_branch
                %2851 = sbr.rel (0) target = $region86
              $region85: #{mil_fc_forward.1} parent=63 // pred_region
                %s2853 = sshrl.u32 %s2787, 2
                // While loop
                $region87: #{mil_fc_forward.1} parent=85 // loop_pre_header
                  _
                $region88: #{mil_fc_forward.1} parent=85 // loop_header
                  %s2855 = sphi 0, %s2857
                  %p2856 = scmp.ge.s32.totalorder %s2855, %s2853
                  %s2860 = sphi 0, %s2873
                  %s2861 = sphi %s2780, %s2876
                  %s2862 = sphi %s2791, %s2877
                $region89: #{mil_fc_forward.1} parent=85 // loop_header_branch
                  %2859 = sbr.rel (%p2856) target = $region93
                $region90: #{mil_fc_forward.1} parent=85 // loop_body
                  %v2863 = vld [vmem:[%s2861] sm:$0xf]
                  %2864 = vst [vmem:[%s2862] sm:$0xf] %v2863
                  %v2865 = vld [vmem:[%s2861 + $0x4] sm:$0xf]
                  %2866 = vst [vmem:[%s2862 + $0x4] sm:$0xf] %v2865
                  %v2867 = vld [vmem:[%s2861 + $0x8] sm:$0xf]
                  %2868 = vst [vmem:[%s2862 + $0x8] sm:$0xf] %v2867
                  %v2869 = vld [vmem:[%s2861 + $0xc] sm:$0xf]
                  %2870 = vst [vmem:[%s2862 + $0xc] sm:$0xf] %v2869
                  %s2871 = sadd.s32 1, %s2860
                  %p2872 = scmp.ge.s32.totalorder %s2871, %s2853
                  %s2873 = scalar_select %p2872, 0, %s2871
                  %s2874 = smul.u32 %s2873, 16
                  %s2875 = smul.u32 %s2873, 16
                  %s2876 = scalar_lea.vmem %s2780, %s2874 [#allocation7]
                  %s2877 = scalar_lea.vmem %s2791, %s2875
                $region91: #{mil_fc_forward.1} parent=85 // loop_footer
                  %s2857 = sadd.s32 %s2855, 1
                $region92: #{mil_fc_forward.1} parent=85 // loop_footer_branch
                  %2854 = sbr.rel target = $region88
                $region93: #{mil_fc_forward.1} parent=85 // loop_exit
                  _
                %s2878 = sshrl.u32 %s2787, 2
                %s2879 = sand.u32 %s2787, 3
                %s2880 = smul.u32 %s2878, 4
                %s2881 = smul.u32 4, %s2880
                %s2882 = scalar_lea.vmem %s2780, %s2881 [#allocation7]
                %s2883 = smul.u32 4, %s2880
                %s2884 = scalar_lea.vmem %s2791, %s2883
                // While loop
                $region94: #{mil_fc_forward.1} parent=85 // loop_pre_header
                  _
                $region95: #{mil_fc_forward.1} parent=85 // loop_header
                  %s2886 = sphi 0, %s2888
                  %p2887 = scmp.ge.s32.totalorder %s2886, %s2879
                  %s2891 = sphi 0, %s2898
                  %s2892 = sphi %s2882, %s2901
                  %s2893 = sphi %s2884, %s2902
                $region96: #{mil_fc_forward.1} parent=85 // loop_header_branch
                  %2890 = sbr.rel (%p2887) target = $region100
                $region97: #{mil_fc_forward.1} parent=85 // loop_body
                  %v2894 = vld [vmem:[%s2892] sm:$0xf]
                  %2895 = vst [vmem:[%s2893] sm:$0xf] %v2894
                  %s2896 = sadd.s32 1, %s2891
                  %p2897 = scmp.ge.s32.totalorder %s2896, %s2879
                  %s2898 = scalar_select %p2897, 0, %s2896
                  %s2899 = smul.u32 %s2898, 4
                  %s2900 = smul.u32 %s2898, 4
                  %s2901 = scalar_lea.vmem %s2882, %s2899 [#allocation7]
                  %s2902 = scalar_lea.vmem %s2884, %s2900
                $region98: #{mil_fc_forward.1} parent=85 // loop_footer
                  %s2888 = sadd.s32 %s2886, 1
                $region99: #{mil_fc_forward.1} parent=85 // loop_footer_branch
                  %2885 = sbr.rel target = $region95
                $region100: #{mil_fc_forward.1} parent=85 // loop_exit
                  _
              $region86: #{mil_fc_forward.1} parent=63 // pred_fallthru
                _
            $region64: #{mil_fc_forward.1} parent=59 // pred_fallthru
              _
            // Predicated region
            $region65: #{mil_fc_forward.1} parent=59 // pred_check
              _
            $region66: #{mil_fc_forward.1} parent=59 // pred_check_branch
              %2798 = sbr.rel (0) target = $region68
            $region67: #{mil_fc_forward.1} parent=59 // pred_region
              %s2800 = sshrl.u32 %s2787, 2
              // While loop
              $region69: #{mil_fc_forward.1} parent=67 // loop_pre_header
                _
              $region70: #{mil_fc_forward.1} parent=67 // loop_header
                %s2802 = sphi 0, %s2804
                %p2803 = scmp.ge.s32.totalorder %s2802, %s2800
                %s2807 = sphi 0, %s2820
                %s2808 = sphi %s2780, %s2823
                %s2809 = sphi %s2791, %s2824
              $region71: #{mil_fc_forward.1} parent=67 // loop_header_branch
                %2806 = sbr.rel (%p2803) target = $region75
              $region72: #{mil_fc_forward.1} parent=67 // loop_body
                %v2810 = vld [vmem:[%s2808] sm:$0xf]
                %2811 = vst [vmem:[%s2809] sm:$0xf] %v2810
                %v2812 = vld [vmem:[%s2808 + $0x4] sm:$0xf]
                %2813 = vst [vmem:[%s2809 + $0x4] sm:$0xf] %v2812
                %v2814 = vld [vmem:[%s2808 + $0x8] sm:$0xf]
                %2815 = vst [vmem:[%s2809 + $0x8] sm:$0xf] %v2814
                %v2816 = vld [vmem:[%s2808 + $0xc] sm:$0xf]
                %2817 = vst [vmem:[%s2809 + $0xc] sm:$0xf] %v2816
                %s2818 = sadd.s32 1, %s2807
                %p2819 = scmp.ge.s32.totalorder %s2818, %s2800
                %s2820 = scalar_select %p2819, 0, %s2818
                %s2821 = smul.u32 %s2820, 16
                %s2822 = smul.u32 %s2820, 16
                %s2823 = scalar_lea.vmem %s2780, %s2821 [#allocation7]
                %s2824 = scalar_lea.vmem %s2791, %s2822
              $region73: #{mil_fc_forward.1} parent=67 // loop_footer
                %s2804 = sadd.s32 %s2802, 1
              $region74: #{mil_fc_forward.1} parent=67 // loop_footer_branch
                %2801 = sbr.rel target = $region70
              $region75: #{mil_fc_forward.1} parent=67 // loop_exit
                _
              %s2825 = sshrl.u32 %s2787, 2
              %s2826 = sand.u32 %s2787, 3
              %s2827 = smul.u32 %s2825, 4
              %s2828 = smul.u32 4, %s2827
              %s2829 = scalar_lea.vmem %s2780, %s2828 [#allocation7]
              %s2830 = smul.u32 4, %s2827
              %s2831 = scalar_lea.vmem %s2791, %s2830
              // While loop
              $region76: #{mil_fc_forward.1} parent=67 // loop_pre_header
                _
              $region77: #{mil_fc_forward.1} parent=67 // loop_header
                %s2833 = sphi 0, %s2835
                %p2834 = scmp.ge.s32.totalorder %s2833, %s2826
                %s2838 = sphi 0, %s2845
                %s2839 = sphi %s2829, %s2848
                %s2840 = sphi %s2831, %s2849
              $region78: #{mil_fc_forward.1} parent=67 // loop_header_branch
                %2837 = sbr.rel (%p2834) target = $region82
              $region79: #{mil_fc_forward.1} parent=67 // loop_body
                %v2841 = vld [vmem:[%s2839] sm:$0xf]
                %2842 = vst [vmem:[%s2840] sm:$0xf] %v2841
                %s2843 = sadd.s32 1, %s2838
                %p2844 = scmp.ge.s32.totalorder %s2843, %s2826
                %s2845 = scalar_select %p2844, 0, %s2843
                %s2846 = smul.u32 %s2845, 4
                %s2847 = smul.u32 %s2845, 4
                %s2848 = scalar_lea.vmem %s2829, %s2846 [#allocation7]
                %s2849 = scalar_lea.vmem %s2831, %s2847
              $region80: #{mil_fc_forward.1} parent=67 // loop_footer
                %s2835 = sadd.s32 %s2833, 1
              $region81: #{mil_fc_forward.1} parent=67 // loop_footer_branch
                %2832 = sbr.rel target = $region77
              $region82: #{mil_fc_forward.1} parent=67 // loop_exit
                _
            $region68: #{mil_fc_forward.1} parent=59 // pred_fallthru
              _
          $region60: #{mil_fc_forward.1} parent=55 // pred_fallthru
            _
          %2903 = vnop
        $region56: #{mil_fc_forward.1} parent=39 // pred_fallthru
          _
      $region40: #{mil_fc_forward.1} parent=5 // pred_fallthru
        _
      %p2904 = scmp.le.s32.totalorder 2, %s15
      // Predicated region
      $region101: #{mil_fc_forward.1} parent=5 // pred_check
        %p2905 = pneg %p2904
      $region102: #{mil_fc_forward.1} parent=5 // pred_check_branch
        %2907 = sbr.rel (%p2905) target = $region104
      $region103: #{mil_fc_forward.1} parent=5 // pred_region
        %s2908 = ssub.s32 %s15, 2
        // Predicated region
        $region105: #{mil_fc_forward.1} parent=103 // pred_check
          %p2909 = pneg %p154
        $region106: #{mil_fc_forward.1} parent=103 // pred_check_branch
          %2911 = sbr.rel (%p2909) target = $region108
        $region107: #{mil_fc_forward.1} parent=103 // pred_region
          %s2912 = sand.u32 %s139, 1
          %s2913 = sand.u32 %s139, 1
          %s2914 = smul.addr %s2913, 16
          %s2915 = scalar_lea.vmem [#allocation7], %s2914
        $region108: #{mil_fc_forward.1} parent=103 // pred_fallthru
          _
      $region104: #{mil_fc_forward.1} parent=5 // pred_fallthru
        _
    $region6: #{mil_fc_forward.1} parent=1 // loop_footer
      %s19 = sadd.s32 1, %s15
    $region7: #{mil_fc_forward.1} parent=1 // loop_footer_branch
      %14 = sbr.rel target = $region3
    $region8: #{mil_fc_forward.1} parent=1 // loop_exit
      _
    %2916 = vsyncpa [#allocation3], 1
    %s2917 = scalar_lea.sflag [#allocation3], 1
    %2918 = vsyncpa %s2917, 1
    %2919 = vsyncpa [#allocation5], 1

</llo_original>
